<compile_context>
chip_gen: v7x
topology: tpu7x:2x2x1
jax: 0.10.0
libtpu: 0.0.40
codegen_flags: <defaults>
</compile_context>

<pallas_src>
import functools

import jax
import jax.numpy as jnp
from jax.experimental import pallas as pl
from jax.experimental.pallas import tpu as pltpu


def _round_up(x, m):
    return ((x + m - 1) // m) * m


def _cdiv(a, b):
    return -(-a // b)


def dynamics_mlp_kernel(x_ref, w1_ref, b1_ref, w2_ref, b2_ref, w3_ref, b3_ref,
                        out_ref, *, precision):
    """Fused 3-layer MLP on one transposed batch tile (features x batch)."""
    x = x_ref[...]                                          # (d_in, tb) io dtype

    # Layer 1 + ReLU: (h1, d_in) @ (d_in, tb) -> (h1, tb), f32 accumulation.
    h1 = jnp.dot(w1_ref[...], x,
                 preferred_element_type=jnp.float32,
                 precision=precision) + b1_ref[...]
    h1 = jnp.maximum(h1, 0.0)

    # Layer 2 + ReLU.
    h2 = jnp.dot(w2_ref[...], h1.astype(w2_ref.dtype),
                 preferred_element_type=jnp.float32,
                 precision=precision) + b2_ref[...]
    h2 = jnp.maximum(h2, 0.0)

    # Output layer (identity activation).
    y = jnp.dot(w3_ref[...], h2.astype(w3_ref.dtype),
                preferred_element_type=jnp.float32,
                precision=precision) + b3_ref[...]

    out_ref[...] = y.astype(out_ref.dtype)                  # (out_dim, tb) dense store


def dynamics_forward(obs, act, params, *, tile_b=4096, io_dtype=jnp.bfloat16):
    """Batch-tiled, lane-dense, pipelined MLP; weights stay VMEM-resident."""
    w1, b1, w2, b2, w3, b3 = params          # w: (fan_in, fan_out), b: (fan_out,) / (1, fan_out)
    batch, obs_dim = obs.shape
    act_dim = act.shape[1]
    d_in = obs_dim + act_dim
    h1_dim = w1.shape[1]
    h2_dim = w2.shape[1]
    out_dim = w3.shape[1]
    io_dtype = jnp.dtype(io_dtype)

    # --- Batch tiling: batch is the lane axis, so tiles are multiples of 128.
    # Balance the tile so the ragged tail wastes at most ~one 128-lane granule
    # per grid step (instead of padding all the way up to tile_b).
    batch128 = _round_up(batch, 128)
    n_steps = _cdiv(batch128, _round_up(min(tile_b, batch128), 128))
    tb = _round_up(_cdiv(batch128, n_steps), 128)
    padded = n_steps * tb

    # --- Single fused layout pass: concat + transpose + cast (+ tail pad).
    xt = jnp.concatenate([obs, act], axis=-1).T.astype(io_dtype)     # (d_in, B)
    if padded != batch:
        xt = jnp.pad(xt, ((0, 0), (0, padded - batch)))

    # Weights transposed to (fan_out, fan_in); biases as (fan_out, 1) f32
    # columns that lane-broadcast inside the kernel.  All of these are tiny,
    # stay VMEM-resident across the whole grid (index_map -> (0, 0)).
    w1t = w1.T.astype(io_dtype)
    w2t = w2.T.astype(io_dtype)
    w3t = w3.T.astype(io_dtype)
    b1c = jnp.reshape(b1, (-1, 1)).astype(jnp.float32)
    b2c = jnp.reshape(b2, (-1, 1)).astype(jnp.float32)
    b3c = jnp.reshape(b3, (-1, 1)).astype(jnp.float32)

    # f32 streaming => request true-f32 MXU passes for parity with reference.
    precision = (jax.lax.Precision.HIGHEST
                 if io_dtype == jnp.dtype(jnp.float32) else None)

    def stream_spec(rows):
        return pl.BlockSpec((rows, tb), lambda i: (0, i))

    def resident_spec(shape):
        return pl.BlockSpec(shape, lambda i: (0, 0))

    out_t = pl.pallas_call(
        functools.partial(dynamics_mlp_kernel, precision=precision),
        out_shape=jax.ShapeDtypeStruct((out_dim, padded), io_dtype),
        grid=(n_steps,),
        in_specs=[
            stream_spec(d_in),                 # x^T tile   (d_in, tb)
            resident_spec((h1_dim, d_in)),     # W1^T
            resident_spec((h1_dim, 1)),        # b1
            resident_spec((h2_dim, h1_dim)),   # W2^T
            resident_spec((h2_dim, 1)),        # b2
            resident_spec((out_dim, h2_dim)),  # W3^T
            resident_spec((out_dim, 1)),       # b3
        ],
        out_specs=stream_spec(out_dim),        # y^T tile (out_dim, tb): lane-dense
        compiler_params=pltpu.CompilerParams(
            dimension_semantics=("parallel",),   # megacore hint (see v7x TODO)
            vmem_limit_bytes=32 * 1024 * 1024,   # explicit budget; tb=4096 uses ~1.5 MiB
        ),
    )(xt, w1t, b1c, w2t, b2c, w3t, b3c)

    # Back to (batch, obs_dim) float32 to match the PyTorch forward contract.
    return out_t[:, :batch].T.astype(jnp.float32)


def init_linear_params(key, fan_in, fan_out):
    """Mimic torch.nn.Linear default init: U[-1/sqrt(fan_in), 1/sqrt(fan_in)]."""
    kw, kb = jax.random.split(key)
    bound = 1.0 / jnp.sqrt(jnp.float32(fan_in))
    w = jax.random.uniform(kw, (fan_in, fan_out), jnp.float32, -bound, bound)
    b = jax.random.uniform(kb, (1, fan_out), jnp.float32, -bound, bound)
    return w, b


def reference_forward(obs, act, params, *, precision=None):
    """Pure-JAX reference for correctness check."""
    w1, b1, w2, b2, w3, b3 = params
    x = jnp.concatenate([obs, act], axis=-1)
    h1 = jnp.maximum(jnp.dot(x, w1, precision=precision) + jnp.reshape(b1, (1, -1)), 0.0)
    h2 = jnp.maximum(jnp.dot(h1, w2, precision=precision) + jnp.reshape(b2, (1, -1)), 0.0)
    return jnp.dot(h2, w3, precision=precision) + jnp.reshape(b3, (1, -1))


if __name__ == "__main__":
    # Small, module-consistent shapes.  batch=300 with tile_b=128 exercises a
    # multi-step grid (3 steps), resident weights, and the ragged-tail padding.
    batch = 300
    obs_dim = 16
    act_dim = 8
    hidden_sizes = (32, 32)

    key = jax.random.PRNGKey(0)
    k_obs, k_act, k1, k2, k3 = jax.random.split(key, 5)

    obs = jax.random.normal(k_obs, (batch, obs_dim), jnp.float32)
    act = jax.random.normal(k_act, (batch, act_dim), jnp.float32)

    # MLP sizes: [obs_dim + act_dim, *hidden_sizes, obs_dim]
    sizes = [obs_dim + act_dim, *hidden_sizes, obs_dim]
    w1, b1 = init_linear_params(k1, sizes[0], sizes[1])
    w2, b2 = init_linear_params(k2, sizes[1], sizes[2])
    w3, b3 = init_linear_params(k3, sizes[2], sizes[3])
    params = (w1, b1, w2, b2, w3, b3)

    ref = reference_forward(obs, act, params, precision=jax.lax.Precision.HIGHEST)

    # 1) f32 streaming path: strict parity with the f32 reference.
    out_f32 = dynamics_forward(obs, act, params, tile_b=128, io_dtype=jnp.float32)
    out_f32 = jax.block_until_ready(out_f32)
    assert out_f32.shape == (batch, obs_dim)
    assert jnp.allclose(out_f32, ref, atol=1e-4, rtol=1e-4), "f32 path mismatch vs reference"

    # 2) Default production path: bf16 streaming, f32 accumulation, tile_b=4096.
    out_bf16 = dynamics_forward(obs, act, params)
    out_bf16 = jax.block_until_ready(out_bf16)
    assert out_bf16.shape == (batch, obs_dim)
    assert jnp.allclose(out_bf16, ref, atol=5e-2, rtol=5e-2), "bf16 path mismatch vs reference"

    print("KERNEL_OK")
</pallas_src>

<mosaic_0001>
module attributes {stable_mosaic.version = 11 : i64} {
  func.func @dynamics_mlp_kernel(%arg0: i32, %arg1: memref<24x128xf32, #tpu.memory_space<vmem>>, %arg2: memref<32x24xf32, #tpu.memory_space<vmem>>, %arg3: memref<32x1xf32, #tpu.memory_space<vmem>>, %arg4: memref<32x32xf32, #tpu.memory_space<vmem>>, %arg5: memref<32x1xf32, #tpu.memory_space<vmem>>, %arg6: memref<16x32xf32, #tpu.memory_space<vmem>>, %arg7: memref<16x1xf32, #tpu.memory_space<vmem>>, %arg8: memref<16x128xf32, #tpu.memory_space<vmem>>) attributes {dimension_semantics = [#tpu.dimension_semantics<parallel>], iteration_bounds = array<i64: 3>, scalar_prefetch = 0 : i64, scratch_operands = 0 : i64, tpu.core_type = #tpu.core_type<tc>, window_params = [{transform_indices = @transform_0, window_bounds = array<i64: 24, 128>}, {pipeline_mode = #tpu.pipeline_mode<synchronous>, transform_indices = @transform_1, window_bounds = array<i64: 32, 24>}, {pipeline_mode = #tpu.pipeline_mode<synchronous>, transform_indices = @transform_2, window_bounds = array<i64: 32, 1>}, {pipeline_mode = #tpu.pipeline_mode<synchronous>, transform_indices = @transform_3, window_bounds = array<i64: 32, 32>}, {pipeline_mode = #tpu.pipeline_mode<synchronous>, transform_indices = @transform_4, window_bounds = array<i64: 32, 1>}, {pipeline_mode = #tpu.pipeline_mode<synchronous>, transform_indices = @transform_5, window_bounds = array<i64: 16, 32>}, {pipeline_mode = #tpu.pipeline_mode<synchronous>, transform_indices = @transform_6, window_bounds = array<i64: 16, 1>}, {transform_indices = @transform_7, window_bounds = array<i64: 16, 128>}]} {
    %c0 = arith.constant 0 : index
    %c0_0 = arith.constant 0 : index
    %0 = vector.load %arg1[%c0, %c0_0] : memref<24x128xf32, #tpu.memory_space<vmem>>, vector<24x128xf32>
    %c0_1 = arith.constant 0 : index
    %c0_2 = arith.constant 0 : index
    %1 = vector.load %arg2[%c0_1, %c0_2] : memref<32x24xf32, #tpu.memory_space<vmem>>, vector<32x24xf32>
    %cst = arith.constant dense<0.000000e+00> : vector<32x128xf32>
    %2 = tpu.matmul %1, %0, %cst {dimension_numbers = #tpu.dot_dimension_numbers<[1], [0], [0], [1], [0, 0, 1, 1], [], []>, precision = #tpu.contract_precision<fp32>} : vector<32x24xf32>, vector<24x128xf32>, vector<32x128xf32> -> vector<32x128xf32>
    %c0_3 = arith.constant 0 : index
    %c0_4 = arith.constant 0 : index
    %3 = vector.load %arg3[%c0_3, %c0_4] : memref<32x1xf32, #tpu.memory_space<vmem>>, vector<32x1xf32>
    %4 = vector.broadcast %3 : vector<32x1xf32> to vector<32x128xf32>
    %5 = arith.addf %2, %4 : vector<32x128xf32>
    %cst_5 = arith.constant 0.000000e+00 : f32
    %6 = vector.broadcast %cst_5 : f32 to vector<32x128xf32>
    %7 = arith.maximumf %5, %6 : vector<32x128xf32>
    %c0_6 = arith.constant 0 : index
    %c0_7 = arith.constant 0 : index
    %8 = vector.load %arg4[%c0_6, %c0_7] : memref<32x32xf32, #tpu.memory_space<vmem>>, vector<32x32xf32>
    %cst_8 = arith.constant dense<0.000000e+00> : vector<32x128xf32>
    %9 = tpu.matmul %8, %7, %cst_8 {dimension_numbers = #tpu.dot_dimension_numbers<[1], [0], [0], [1], [0, 0, 1, 1], [], []>, precision = #tpu.contract_precision<fp32>} : vector<32x32xf32>, vector<32x128xf32>, vector<32x128xf32> -> vector<32x128xf32>
    %c0_9 = arith.constant 0 : index
    %c0_10 = arith.constant 0 : index
    %10 = vector.load %arg5[%c0_9, %c0_10] : memref<32x1xf32, #tpu.memory_space<vmem>>, vector<32x1xf32>
    %11 = vector.broadcast %10 : vector<32x1xf32> to vector<32x128xf32>
    %12 = arith.addf %9, %11 : vector<32x128xf32>
    %cst_11 = arith.constant 0.000000e+00 : f32
    %13 = vector.broadcast %cst_11 : f32 to vector<32x128xf32>
    %14 = arith.maximumf %12, %13 : vector<32x128xf32>
    %c0_12 = arith.constant 0 : index
    %c0_13 = arith.constant 0 : index
    %15 = vector.load %arg6[%c0_12, %c0_13] : memref<16x32xf32, #tpu.memory_space<vmem>>, vector<16x32xf32>
    %cst_14 = arith.constant dense<0.000000e+00> : vector<16x128xf32>
    %16 = tpu.matmul %15, %14, %cst_14 {dimension_numbers = #tpu.dot_dimension_numbers<[1], [0], [0], [1], [0, 0, 1, 1], [], []>, precision = #tpu.contract_precision<fp32>} : vector<16x32xf32>, vector<32x128xf32>, vector<16x128xf32> -> vector<16x128xf32>
    %c0_15 = arith.constant 0 : index
    %c0_16 = arith.constant 0 : index
    %17 = vector.load %arg7[%c0_15, %c0_16] : memref<16x1xf32, #tpu.memory_space<vmem>>, vector<16x1xf32>
    %18 = vector.broadcast %17 : vector<16x1xf32> to vector<16x128xf32>
    %19 = arith.addf %16, %18 : vector<16x128xf32>
    %c0_17 = arith.constant 0 : index
    %c0_18 = arith.constant 0 : index
    %20 = vector.load %arg8[%c0_17, %c0_18] : memref<16x128xf32, #tpu.memory_space<vmem>>, vector<16x128xf32>
    tpu.vector_store %arg8[%c0_17, %c0_18], %19 {strides = array<i32>} : memref<16x128xf32, #tpu.memory_space<vmem>>, vector<16x128xf32>,
    return
  }
  func.func @transform_0(%arg0: i32) -> (i32, i32) {
    %c0_i32 = arith.constant 0 : i32
    %c0_i32_0 = arith.constant 0 : i32
    return %c0_i32, %arg0 : i32, i32
  }
  func.func @transform_1(%arg0: i32) -> (i32, i32) {
    %c0_i32 = arith.constant 0 : i32
    %c0_i32_0 = arith.constant 0 : i32
    %c0_i32_1 = arith.constant 0 : i32
    return %c0_i32, %c0_i32_0 : i32, i32
  }
  func.func @transform_2(%arg0: i32) -> (i32, i32) {
    %c0_i32 = arith.constant 0 : i32
    %c0_i32_0 = arith.constant 0 : i32
    %c0_i32_1 = arith.constant 0 : i32
    return %c0_i32, %c0_i32_0 : i32, i32
  }
  func.func @transform_3(%arg0: i32) -> (i32, i32) {
    %c0_i32 = arith.constant 0 : i32
    %c0_i32_0 = arith.constant 0 : i32
    %c0_i32_1 = arith.constant 0 : i32
    return %c0_i32, %c0_i32_0 : i32, i32
  }
  func.func @transform_4(%arg0: i32) -> (i32, i32) {
    %c0_i32 = arith.constant 0 : i32
    %c0_i32_0 = arith.constant 0 : i32
    %c0_i32_1 = arith.constant 0 : i32
    return %c0_i32, %c0_i32_0 : i32, i32
  }
  func.func @transform_5(%arg0: i32) -> (i32, i32) {
    %c0_i32 = arith.constant 0 : i32
    %c0_i32_0 = arith.constant 0 : i32
    %c0_i32_1 = arith.constant 0 : i32
    return %c0_i32, %c0_i32_0 : i32, i32
  }
  func.func @transform_6(%arg0: i32) -> (i32, i32) {
    %c0_i32 = arith.constant 0 : i32
    %c0_i32_0 = arith.constant 0 : i32
    %c0_i32_1 = arith.constant 0 : i32
    return %c0_i32, %c0_i32_0 : i32, i32
  }
  func.func @transform_7(%arg0: i32) -> (i32, i32) {
    %c0_i32 = arith.constant 0 : i32
    %c0_i32_0 = arith.constant 0 : i32
    return %c0_i32, %arg0 : i32, i32
  }
}

</mosaic_0001>

<llo_original>
// kernel: tpu_custom_call.1
$region0: #{tpu_custom_call.1}
  #allocation0 [shape = 'u32[]', space=smem, size = 0x4, offset = 0x4, fixed_abs, tag = 'smem constant byte address 0x4 - core index']
  #allocation1 [shape = 'u32[144,128]{1,0:T(1,128)}', space=vmem, size = 0x12000, scoped, tag = 'internal scratch']
  %s0 = inlined_call_operand.vmem [shape: f32[24,384], index: 0, kind: input, shape index: {}]
  %s1 = inlined_call_operand.vmem [shape: f32[32,24], index: 1, kind: input, shape index: {}]
  %s2 = inlined_call_operand.vmem [shape: f32[32,1], index: 2, kind: input, shape index: {}]
  %s3 = inlined_call_operand.vmem [shape: f32[32,32], index: 3, kind: input, shape index: {}]
  %s4 = inlined_call_operand.vmem [shape: f32[32,1], index: 4, kind: input, shape index: {}]
  %s5 = inlined_call_operand.vmem [shape: f32[16,32], index: 5, kind: input, shape index: {}]
  %s6 = inlined_call_operand.vmem [shape: f32[16,1], index: 6, kind: input, shape index: {}]
  %s7 = inlined_call_operand.hbm [shape: f32[16,384], index: 7, kind: output, shape index: {}]
  %s8 = sld [smem:[#allocation0]]
  $region99: #{tpu_custom_call.1} parent=0
    _
  %s10 = ssub.s32 1, %s8
  %s11 = scalar_select 0, %s10, %s8
  $region1: #{tpu_custom_call.1} parent=0
    #allocation2 [shape = 'u8[24576]{0}', space=vmem, size = 0x6000, scoped, tag = 'input window, operand 0']
    #allocation3 [shape = 'u8[16384]{0}', space=vmem, size = 0x4000, scoped, tag = 'output window, operand 0']
    #allocation4 [shape = 's32[2]{0}', space=sflag, size = 0x8, scoped, tag = 'scoped memory for tpu_custom_call.1']
    %12 = vsyncpa [#allocation4], 0
    %s13 = scalar_lea.sflag [#allocation4], 1
    %14 = vsyncpa %s13, 0
    loop: start=0, step=1, limit=5
    $region2: #{tpu_custom_call.1} parent=1 // loop_pre_header
      _
    $region3: #{tpu_custom_call.1} parent=1 // loop_header
      %s16 = sphi 0, %s20
      %p17 = scmp.ge.s32.totalorder %s16, 5
      %s26 = sphi 0, %s28
      %s29 = sphi 0, %s26
      %s30 = sphi 0, %s29
      %s46 = sphi 0, %s30
      %s50 = sphi 0, %s50
      %s52 = sphi 0, %s50
      %s53 = sphi 0, %s52
      %s67 = sphi 0, %s53
      %s71 = sphi 0, %s71
      %s73 = sphi 0, %s71
      %s74 = sphi 0, %s73
      %s88 = sphi 0, %s74
      %s92 = sphi 0, %s92
      %s94 = sphi 0, %s92
      %s95 = sphi 0, %s94
      %s109 = sphi 0, %s95
      %s113 = sphi 0, %s113
      %s115 = sphi 0, %s113
      %s116 = sphi 0, %s115
      %s130 = sphi 0, %s116
      %s134 = sphi 0, %s134
      %s136 = sphi 0, %s134
      %s137 = sphi 0, %s136
      %s151 = sphi 0, %s137
      %s155 = sphi 0, %s155
      %s157 = sphi 0, %s155
      %s158 = sphi 0, %s157
      %s172 = sphi 0, %s158
      %s178 = sphi 0, %s180
      %s181 = sphi 0, %s178
      %s182 = sphi 0, %s181
      %s198 = sphi 0, %s182
    $region4: #{tpu_custom_call.1} parent=1 // loop_header_branch
      %19 = sbr.rel (%p17) target = $region8
    $region5: #{tpu_custom_call.1} parent=1 // loop_body
      %s21 = ssub.s32 %s16, 1
      %s22 = ssub.s32 %s16, 2
      %s23 = sadd.s32 %s16, 1
      %s24 = ssub.s32 %s16, %s23
      %p25 = scmp.eq.s32.totalorder %s24, 0
      %s27 = sadd.s32 %s26, 1
      %s28 = scalar_select %p25, %s26, %s27
      %p31 = pneg %p25
      %p32 = scmp.eq.s32.totalorder %s16, 2
      %p33 = por %p31, %p32
      %p34 = scmp.ne.s32.totalorder %s26, %s29
      %p35 = scmp.eq.s32.totalorder %s16, 0
      %p36 = por %p34, %p35
      %p37 = scmp.ne.s32.totalorder %s26, %s29
      %p38 = scmp.eq.s32.totalorder %s21, 2
      %p39 = por %p37, %p38
      %p40 = scmp.ne.s32.totalorder %s29, %s30
      %p41 = scmp.eq.s32.totalorder %s21, 0
      %p42 = por %p40, %p41
      %p43 = scmp.ne.s32.totalorder %s29, %s30
      %p44 = scmp.eq.s32.totalorder %s22, 2
      %p45 = por %p43, %p44
      %p47 = scmp.ne.s32.totalorder %s30, %s46
      %p48 = scmp.eq.s32.totalorder %s22, 0
      %p49 = por %p47, %p48
      %s51 = sadd.s32 %s50, 1
      %p54 = scmp.eq.s32.totalorder %s16, 2
      %p55 = scmp.ne.s32.totalorder %s50, %s52
      %p56 = scmp.eq.s32.totalorder %s16, 0
      %p57 = por %p55, %p56
      %p58 = scmp.ne.s32.totalorder %s50, %s52
      %p59 = scmp.eq.s32.totalorder %s21, 2
      %p60 = por %p58, %p59
      %p61 = scmp.ne.s32.totalorder %s52, %s53
      %p62 = scmp.eq.s32.totalorder %s21, 0
      %p63 = por %p61, %p62
      %p64 = scmp.ne.s32.totalorder %s52, %s53
      %p65 = scmp.eq.s32.totalorder %s22, 2
      %p66 = por %p64, %p65
      %p68 = scmp.ne.s32.totalorder %s53, %s67
      %p69 = scmp.eq.s32.totalorder %s22, 0
      %p70 = por %p68, %p69
      %s72 = sadd.s32 %s71, 1
      %p75 = scmp.eq.s32.totalorder %s16, 2
      %p76 = scmp.ne.s32.totalorder %s71, %s73
      %p77 = scmp.eq.s32.totalorder %s16, 0
      %p78 = por %p76, %p77
      %p79 = scmp.ne.s32.totalorder %s71, %s73
      %p80 = scmp.eq.s32.totalorder %s21, 2
      %p81 = por %p79, %p80
      %p82 = scmp.ne.s32.totalorder %s73, %s74
      %p83 = scmp.eq.s32.totalorder %s21, 0
      %p84 = por %p82, %p83
      %p85 = scmp.ne.s32.totalorder %s73, %s74
      %p86 = scmp.eq.s32.totalorder %s22, 2
      %p87 = por %p85, %p86
      %p89 = scmp.ne.s32.totalorder %s74, %s88
      %p90 = scmp.eq.s32.totalorder %s22, 0
      %p91 = por %p89, %p90
      %s93 = sadd.s32 %s92, 1
      %p96 = scmp.eq.s32.totalorder %s16, 2
      %p97 = scmp.ne.s32.totalorder %s92, %s94
      %p98 = scmp.eq.s32.totalorder %s16, 0
      %p99 = por %p97, %p98
      %p100 = scmp.ne.s32.totalorder %s92, %s94
      %p101 = scmp.eq.s32.totalorder %s21, 2
      %p102 = por %p100, %p101
      %p103 = scmp.ne.s32.totalorder %s94, %s95
      %p104 = scmp.eq.s32.totalorder %s21, 0
      %p105 = por %p103, %p104
      %p106 = scmp.ne.s32.totalorder %s94, %s95
      %p107 = scmp.eq.s32.totalorder %s22, 2
      %p108 = por %p106, %p107
      %p110 = scmp.ne.s32.totalorder %s95, %s109
      %p111 = scmp.eq.s32.totalorder %s22, 0
      %p112 = por %p110, %p111
      %s114 = sadd.s32 %s113, 1
      %p117 = scmp.eq.s32.totalorder %s16, 2
      %p118 = scmp.ne.s32.totalorder %s113, %s115
      %p119 = scmp.eq.s32.totalorder %s16, 0
      %p120 = por %p118, %p119
      %p121 = scmp.ne.s32.totalorder %s113, %s115
      %p122 = scmp.eq.s32.totalorder %s21, 2
      %p123 = por %p121, %p122
      %p124 = scmp.ne.s32.totalorder %s115, %s116
      %p125 = scmp.eq.s32.totalorder %s21, 0
      %p126 = por %p124, %p125
      %p127 = scmp.ne.s32.totalorder %s115, %s116
      %p128 = scmp.eq.s32.totalorder %s22, 2
      %p129 = por %p127, %p128
      %p131 = scmp.ne.s32.totalorder %s116, %s130
      %p132 = scmp.eq.s32.totalorder %s22, 0
      %p133 = por %p131, %p132
      %s135 = sadd.s32 %s134, 1
      %p138 = scmp.eq.s32.totalorder %s16, 2
      %p139 = scmp.ne.s32.totalorder %s134, %s136
      %p140 = scmp.eq.s32.totalorder %s16, 0
      %p141 = por %p139, %p140
      %p142 = scmp.ne.s32.totalorder %s134, %s136
      %p143 = scmp.eq.s32.totalorder %s21, 2
      %p144 = por %p142, %p143
      %p145 = scmp.ne.s32.totalorder %s136, %s137
      %p146 = scmp.eq.s32.totalorder %s21, 0
      %p147 = por %p145, %p146
      %p148 = scmp.ne.s32.totalorder %s136, %s137
      %p149 = scmp.eq.s32.totalorder %s22, 2
      %p150 = por %p148, %p149
      %p152 = scmp.ne.s32.totalorder %s137, %s151
      %p153 = scmp.eq.s32.totalorder %s22, 0
      %p154 = por %p152, %p153
      %s156 = sadd.s32 %s155, 1
      %p159 = scmp.eq.s32.totalorder %s16, 2
      %p160 = scmp.ne.s32.totalorder %s155, %s157
      %p161 = scmp.eq.s32.totalorder %s16, 0
      %p162 = por %p160, %p161
      %p163 = scmp.ne.s32.totalorder %s155, %s157
      %p164 = scmp.eq.s32.totalorder %s21, 2
      %p165 = por %p163, %p164
      %p166 = scmp.ne.s32.totalorder %s157, %s158
      %p167 = scmp.eq.s32.totalorder %s21, 0
      %p168 = por %p166, %p167
      %p169 = scmp.ne.s32.totalorder %s157, %s158
      %p170 = scmp.eq.s32.totalorder %s22, 2
      %p171 = por %p169, %p170
      %p173 = scmp.ne.s32.totalorder %s158, %s172
      %p174 = scmp.eq.s32.totalorder %s22, 0
      %p175 = por %p173, %p174
      %s176 = ssub.s32 %s16, %s23
      %p177 = scmp.eq.s32.totalorder %s176, 0
      %s179 = sadd.s32 %s178, 1
      %s180 = scalar_select %p177, %s178, %s179
      %p183 = pneg %p177
      %p184 = scmp.eq.s32.totalorder %s16, 2
      %p185 = por %p183, %p184
      %p186 = scmp.ne.s32.totalorder %s178, %s181
      %p187 = scmp.eq.s32.totalorder %s16, 0
      %p188 = por %p186, %p187
      %p189 = scmp.ne.s32.totalorder %s178, %s181
      %p190 = scmp.eq.s32.totalorder %s21, 2
      %p191 = por %p189, %p190
      %p192 = scmp.ne.s32.totalorder %s181, %s182
      %p193 = scmp.eq.s32.totalorder %s21, 0
      %p194 = por %p192, %p193
      %p195 = scmp.ne.s32.totalorder %s181, %s182
      %p196 = scmp.eq.s32.totalorder %s22, 2
      %p197 = por %p195, %p196
      %p199 = scmp.ne.s32.totalorder %s182, %s198
      %p200 = scmp.eq.s32.totalorder %s22, 0
      %p201 = por %p199, %p200
      %p202 = scmp.le.s32.totalorder 1, %s16
      %p203 = scmp.lt.s32.totalorder %s16, 4
      %p204 = pnand %p202, %p203
      %p205 = pneg %p204
      // Predicated region
      $region9: #{tpu_custom_call.1} parent=5 // pred_check
        _
      $region10: #{tpu_custom_call.1} parent=5 // pred_check_branch
        %207 = sbr.rel (%p204) target = $region12
      $region11: #{tpu_custom_call.1} parent=5 // pred_region
        %s208 = ssub.s32 %s16, 1
        // Predicated region
        $region13: #{tpu_custom_call.1} parent=11 // pred_check
          %p209 = pneg %p63
        $region14: #{tpu_custom_call.1} parent=11 // pred_check_branch
          %211 = sbr.rel (%p209) target = $region16
        $region15: #{tpu_custom_call.1} parent=11 // pred_region
          _
        $region16: #{tpu_custom_call.1} parent=11 // pred_fallthru
          _
        // Predicated region
        $region17: #{tpu_custom_call.1} parent=11 // pred_check
          %p212 = pneg %p84
        $region18: #{tpu_custom_call.1} parent=11 // pred_check_branch
          %214 = sbr.rel (%p212) target = $region20
        $region19: #{tpu_custom_call.1} parent=11 // pred_region
          _
        $region20: #{tpu_custom_call.1} parent=11 // pred_fallthru
          _
        // Predicated region
        $region21: #{tpu_custom_call.1} parent=11 // pred_check
          %p215 = pneg %p105
        $region22: #{tpu_custom_call.1} parent=11 // pred_check_branch
          %217 = sbr.rel (%p215) target = $region24
        $region23: #{tpu_custom_call.1} parent=11 // pred_region
          _
        $region24: #{tpu_custom_call.1} parent=11 // pred_fallthru
          _
        // Predicated region
        $region25: #{tpu_custom_call.1} parent=11 // pred_check
          %p218 = pneg %p126
        $region26: #{tpu_custom_call.1} parent=11 // pred_check_branch
          %220 = sbr.rel (%p218) target = $region28
        $region27: #{tpu_custom_call.1} parent=11 // pred_region
          _
        $region28: #{tpu_custom_call.1} parent=11 // pred_fallthru
          _
        // Predicated region
        $region29: #{tpu_custom_call.1} parent=11 // pred_check
          %p221 = pneg %p147
        $region30: #{tpu_custom_call.1} parent=11 // pred_check_branch
          %223 = sbr.rel (%p221) target = $region32
        $region31: #{tpu_custom_call.1} parent=11 // pred_region
          _
        $region32: #{tpu_custom_call.1} parent=11 // pred_fallthru
          _
        // Predicated region
        $region33: #{tpu_custom_call.1} parent=11 // pred_check
          %p224 = pneg %p168
        $region34: #{tpu_custom_call.1} parent=11 // pred_check_branch
          %226 = sbr.rel (%p224) target = $region36
        $region35: #{tpu_custom_call.1} parent=11 // pred_region
          _
        $region36: #{tpu_custom_call.1} parent=11 // pred_fallthru
          _
      $region12: #{tpu_custom_call.1} parent=5 // pred_fallthru
        _
      %p227 = scmp.lt.s32.totalorder %s16, 3
      // Predicated region
      $region37: #{tpu_custom_call.1} parent=5 // pred_check
        %p228 = pneg %p227
      $region38: #{tpu_custom_call.1} parent=5 // pred_check_branch
        %230 = sbr.rel (%p228) target = $region40
      $region39: #{tpu_custom_call.1} parent=5 // pred_region
        // Predicated region
        $region41: #{tpu_custom_call.1} parent=39 // pred_check
          %p231 = pneg %p36
        $region42: #{tpu_custom_call.1} parent=39 // pred_check_branch
          %233 = sbr.rel (%p231) target = $region44
        $region43: #{tpu_custom_call.1} parent=39 // pred_region
          %s234 = sand.u32 %s26, 1
          %s235 = sand.u32 %s26, 1
          %s236 = smul.addr %s235, 24
          %s237 = scalar_lea.vmem [#allocation2], %s236
          %s238 = smul.addr %s16, 8
          %s239 = scalar_lea.vmem %s0, %s238
          // Predicated region
          $region45: #{tpu_custom_call.1} parent=43 // pred_check
            _
          $region46: #{tpu_custom_call.1} parent=43 // pred_check_branch
            %241 = sbr.rel (0) target = $region48
          $region47: #{tpu_custom_call.1} parent=43 // pred_region
            // Predicated region
            $region49: #{tpu_custom_call.1} parent=47 // pred_check
              _
            $region50: #{tpu_custom_call.1} parent=47 // pred_check_branch
              %243 = sbr.rel (0) target = $region52
            $region51: #{tpu_custom_call.1} parent=47 // pred_region
              // Predicated region
              $region64: #{tpu_custom_call.1} parent=51 // pred_check
                _
              $region65: #{tpu_custom_call.1} parent=51 // pred_check_branch
                %262 = sbr.rel (0) target = $region67
              $region66: #{tpu_custom_call.1} parent=51 // pred_region
                loop: start=0, step=1, limit=1
                $region68: #{tpu_custom_call.1} parent=66 // loop_pre_header
                  _
                $region69: #{tpu_custom_call.1} parent=66 // loop_header
                  %s264 = sphi 0, %s268
                  %p265 = scmp.ge.s32.totalorder %s264, 1
                  %s269 = sphi %s239, %s239
                  %s270 = sphi %s237, %s237
                $region70: #{tpu_custom_call.1} parent=66 // loop_header_branch
                  %267 = sbr.rel (%p265) target = $region74
                $region71: #{tpu_custom_call.1} parent=66 // loop_body
                  %v271 = vld [vmem:[%s269] sm:$0xff]
                  %272 = vst [vmem:[%s270] sm:$0xff] %v271
                  %v273 = vld [vmem:[%s269 + $0x18] sm:$0xff]
                  %274 = vst [vmem:[%s270 + $0x8] sm:$0xff] %v273
                  %v275 = vld [vmem:[%s269 + $0x30] sm:$0xff]
                  %276 = vst [vmem:[%s270 + $0x10] sm:$0xff] %v275
                $region72: #{tpu_custom_call.1} parent=66 // loop_footer
                  %s268 = sadd.s32 1, %s264
                $region73: #{tpu_custom_call.1} parent=66 // loop_footer_branch
                  %263 = sbr.rel target = $region69
                $region74: #{tpu_custom_call.1} parent=66 // loop_exit
                  _
              $region67: #{tpu_custom_call.1} parent=51 // pred_fallthru
                _
              // Predicated region
              $region75: #{tpu_custom_call.1} parent=51 // pred_check
                _
              $region76: #{tpu_custom_call.1} parent=51 // pred_check_branch
                %278 = sbr.rel target = $region78
              $region77: #{tpu_custom_call.1} parent=51 // pred_region
                _
              $region78: #{tpu_custom_call.1} parent=51 // pred_fallthru
                _
            $region52: #{tpu_custom_call.1} parent=47 // pred_fallthru
              _
            // Predicated region
            $region53: #{tpu_custom_call.1} parent=47 // pred_check
              _
            $region54: #{tpu_custom_call.1} parent=47 // pred_check_branch
              %245 = sbr.rel target = $region56
            $region55: #{tpu_custom_call.1} parent=47 // pred_region
              loop: start=0, step=1, limit=1
              $region57: #{tpu_custom_call.1} parent=55 // loop_pre_header
                _
              $region58: #{tpu_custom_call.1} parent=55 // loop_header
                %s248 = sphi 0, %s252
                %p249 = scmp.ge.s32.totalorder %s248, 1
                %s253 = sphi %s239, %s239
                %s254 = sphi %s237, %s237
              $region59: #{tpu_custom_call.1} parent=55 // loop_header_branch
                %251 = sbr.rel (%p249) target = $region63
              $region60: #{tpu_custom_call.1} parent=55 // loop_body
                %v255 = vld [vmem:[%s253] sm:$0xff]
                %256 = vst [vmem:[%s254] sm:$0xff] %v255
                %v257 = vld [vmem:[%s253 + $0x18] sm:$0xff]
                %258 = vst [vmem:[%s254 + $0x8] sm:$0xff] %v257
                %v259 = vld [vmem:[%s253 + $0x30] sm:$0xff]
                %260 = vst [vmem:[%s254 + $0x10] sm:$0xff] %v259
              $region61: #{tpu_custom_call.1} parent=55 // loop_footer
                %s252 = sadd.s32 1, %s248
              $region62: #{tpu_custom_call.1} parent=55 // loop_footer_branch
                %247 = sbr.rel target = $region58
              $region63: #{tpu_custom_call.1} parent=55 // loop_exit
                _
            $region56: #{tpu_custom_call.1} parent=47 // pred_fallthru
              _
          $region48: #{tpu_custom_call.1} parent=43 // pred_fallthru
            _
          %279 = vnop
        $region44: #{tpu_custom_call.1} parent=39 // pred_fallthru
          _
      $region40: #{tpu_custom_call.1} parent=5 // pred_fallthru
        _
      %p280 = scmp.le.s32.totalorder 1, %s16
      %p281 = scmp.lt.s32.totalorder %s16, 4
      %p282 = pnand %p280, %p281
      %p283 = pneg %p282
      // Predicated region
      $region79: #{tpu_custom_call.1} parent=5 // pred_check
        _
      $region80: #{tpu_custom_call.1} parent=5 // pred_check_branch
        %285 = sbr.rel (%p282) target = $region82
      $region81: #{tpu_custom_call.1} parent=5 // pred_region
        %s286 = ssub.s32 %s16, 1
        %s287 = sand.u32 %s29, 1
        %s288 = sand.u32 %s29, 1
        %s289 = smul.addr %s288, 24
        %s290 = scalar_lea.vmem [#allocation2], %s289
        // Predicated region
        $region83: #{tpu_custom_call.1} parent=81 // pred_check
          %p291 = pneg %p42
        $region84: #{tpu_custom_call.1} parent=81 // pred_check_branch
          %293 = sbr.rel (%p291) target = $region86
        $region85: #{tpu_custom_call.1} parent=81 // pred_region
          _
        $region86: #{tpu_custom_call.1} parent=81 // pred_fallthru
          _
        %s294 = sand.u32 %s29, 1
        %s295 = sand.u32 %s29, 1
        %s296 = smul.addr %s295, 24
        %s297 = scalar_lea.vmem [#allocation2], %s296
        %p298 = pneg %p42
        %p299 = pneg %p39
        %p300 = pneg %p63
        %p301 = pneg %p60
        %p302 = pneg %p84
        %p303 = pneg %p81
        %p304 = pneg %p105
        %p305 = pneg %p102
        %p306 = pneg %p126
        %p307 = pneg %p123
        %p308 = pneg %p147
        %p309 = pneg %p144
        %p310 = pneg %p168
        %p311 = pneg %p165
        %p312 = pneg %p194
        %p313 = pneg %p191
        %s314 = sand.u32 %s181, 1
        %s315 = scalar_lea.sflag [#allocation4], %s314
        %s316 = sand.u32 %s181, 1
        %s317 = smul.addr %s316, 16
        %s318 = scalar_lea.vmem [#allocation3], %s317
        %v319 = vld [vmem:[%s290] sm:$0xff]
        %v320 = vld [vmem:[%s290 + $0x8] sm:$0xff]
        %v321 = vld [vmem:[%s290 + $0x10] sm:$0xff]
        %v322 = vld [vmem:[%s1] sm:$0xff]
        %v323 = vld [vmem:[%s1 + $0x8] sm:$0xff]
        %v324 = vld [vmem:[%s1 + $0x10] sm:$0xff]
        %v325 = vld [vmem:[%s1 + $0x18] sm:$0xff]
        %v326 = vld [vmem:[%s2] sm:$0xff]
        %v327 = vld [vmem:[%s2 + $0x8] sm:$0xff]
        %v328 = vld [vmem:[%s2 + $0x10] sm:$0xff]
        %v329 = vld [vmem:[%s2 + $0x18] sm:$0xff]
        %331 = vset.pattern.permute.xlu0 0
        %332 = vperm.xlu0 %331, %v326
        %v333 = vpop.permute.xlu0 %332
        %336 = vset.pattern.permute.xlu0 0
        %337 = vperm.xlu0 %336, %v327
        %v338 = vpop.permute.xlu0 %337
        %341 = vset.pattern.permute.xlu0 0
        %342 = vperm.xlu0 %341, %v328
        %v343 = vpop.permute.xlu0 %342
        %346 = vset.pattern.permute.xlu0 0
        %347 = vperm.xlu0 %346, %v329
        %v348 = vpop.permute.xlu0 %347
        %vm350 = vcmask 195584
        %v352 = vsel %vm350, %v322, 0
        %v355 = vsel %vm350, %v323, 0
        %v358 = vsel %vm350, %v324, 0
        %v361 = vsel %vm350, %v325, 0
        %363 = vmatprep.subr.mxu0 0.0
        %v364 = vand.u32 %v319, 4294901760
        %365 = vmatpush1.msra.mxu0 %v364
        %366 = vmatprep.subr.mxu0 0.0
        %v367 = vand.u32 %v320, 4294901760
        %368 = vmatpush1.msra.mxu0 %v367
        %369 = vmatprep.subr.mxu0 0.0
        %v370 = vand.u32 %v321, 4294901760
        %371 = vmatpush1.msra.mxu0 %v370
        %372 = vmatprep.subr.mxu0 0.0
        %373 = vmatpush1.msra.mxu0 0.0
        %374 = vmatprep.subr.mxu0 0.0
        %375 = vmatpush1.msra.mxu0 0.0
        %376 = vmatprep.subr.mxu0 0.0
        %377 = vmatpush1.msra.mxu0 0.0
        %378 = vmatprep.subr.mxu0 0.0
        %379 = vmatpush1.msra.mxu0 0.0
        %380 = vmatprep.subr.mxu0 0.0
        %381 = vmatpush1.msra.mxu0 0.0
        %382 = vmatprep.subr.mxu0 0.0
        %383 = vmatpush1.msra.mxu0 0.0
        %384 = vmatprep.subr.mxu0 0.0
        %385 = vmatpush1.msra.mxu0 0.0
        %386 = vmatprep.subr.mxu0 0.0
        %387 = vmatpush1.msra.mxu0 0.0
        %388 = vmatprep.subr.mxu0 0.0
        %389 = vmatpush1.msra.mxu0 0.0
        %390 = vmatprep.subr.mxu0 0.0
        %391 = vmatpush1.msra.mxu0 0.0
        %392 = vmatprep.subr.mxu0 0.0
        %393 = vmatpush1.msra.mxu0 0.0
        %394 = vmatprep.subr.mxu0 0.0
        %395 = vmatpush1.msra.mxu0 0.0
        %396 = vmatprep.subr.mxu0 0.0
        %397 = vmatpush1.msra.mxu0 0.0
        %398 = vmatprep.subr.mxu0 0.0
        %399 = vmatpush1.msra.mxu0 0.0
        %400 = vmatprep.subr.mxu0 0.0
        %401 = vmatpush1.msra.mxu0 0.0
        %402 = vmatprep.subr.mxu0 0.0
        %403 = vmatpush1.msra.mxu0 0.0
        %404 = vmatprep.subr.mxu0 0.0
        %405 = vmatpush1.msra.mxu0 0.0
        %406 = vmatprep.subr.mxu0 0.0
        %407 = vmatpush1.msra.mxu0 0.0
        %408 = vmatprep.subr.mxu0 0.0
        %409 = vmatpush1.msra.mxu0 0.0
        %410 = vmatprep.subr.mxu0 0.0
        %411 = vmatpush1.msra.mxu0 0.0
        %412 = vmatprep.subr.mxu0 0.0
        %413 = vmatpush1.msra.mxu0 0.0
        %414 = vmatprep.subr.mxu0 0.0
        %415 = vmatpush1.msra.mxu0 0.0
        %416 = vmatprep.subr.mxu0 0.0
        %417 = vmatpush1.msra.mxu0 0.0
        %418 = vmatprep.subr.mxu0 0.0
        %419 = vmatpush1.msra.mxu0 0.0
        %420 = vmatprep.subr.mxu0 0.0
        %421 = vmatpush1.msra.mxu0 0.0
        %422 = vmatprep.subr.mxu0 0.0
        %423 = vmatpush1.msra.mxu0 0.0
        %424 = vmatprep.subr.mxu0 0.0
        %425 = vmatpush1.msra.mxu0 0.0
        %426 = vmatprep.subr.mxu0 0.0
        %427 = vmatpush1.msra.mxu0 0.0
        %428 = vmatprep.subr.mxu0 0.0
        %429 = vmatpush1.msra.mxu0 0.0
        %430 = vmatprep.mubr.f32.mxu0 0.0
        %v431 = vand.u32 %v352, 4294901760
        %v432 = vsub.f32 %v352, %v431
        %v433 = vand.u32 %v432, 4294901760
        %v434 = vsub.f32 %v432, %v433
        %v435 = vand.u32 %v434, 4294901760
        %436 = vmatmul.mubr.f32.gmra.mrb[0].mxu0 %v435
        %v437 = vpop.f32.mrb[0].mxu0
        %v438 = vadd.f32 %v333, %v437
        %v439 = vpop.f32.mrb[0].mxu0
        %440 = vmatprep.mubr.f32.mxu0 0.0
        %v441 = vand.u32 %v355, 4294901760
        %v442 = vsub.f32 %v355, %v441
        %v443 = vand.u32 %v442, 4294901760
        %v444 = vsub.f32 %v442, %v443
        %v445 = vand.u32 %v444, 4294901760
        %446 = vmatmul.mubr.f32.gmra.mrb[0].mxu0 %v445
        %v447 = vpop.f32.mrb[0].mxu0
        %v448 = vadd.f32 %v338, %v447
        %v449 = vpop.f32.mrb[0].mxu0
        %450 = vmatprep.mubr.f32.mxu0 0.0
        %v451 = vand.u32 %v358, 4294901760
        %v452 = vsub.f32 %v358, %v451
        %v453 = vand.u32 %v452, 4294901760
        %v454 = vsub.f32 %v452, %v453
        %v455 = vand.u32 %v454, 4294901760
        %456 = vmatmul.mubr.f32.gmra.mrb[0].mxu0 %v455
        %v457 = vpop.f32.mrb[0].mxu0
        %v458 = vadd.f32 %v343, %v457
        %v459 = vpop.f32.mrb[0].mxu0
        %460 = vmatprep.mubr.f32.mxu0 0.0
        %v461 = vand.u32 %v361, 4294901760
        %v462 = vsub.f32 %v361, %v461
        %v463 = vand.u32 %v462, 4294901760
        %v464 = vsub.f32 %v462, %v463
        %v465 = vand.u32 %v464, 4294901760
        %466 = vmatmul.mubr.f32.gmra.mrb[0].mxu0 %v465
        %v467 = vpop.f32.mrb[0].mxu0
        %v468 = vadd.f32 %v348, %v467
        %v469 = vpop.f32.mrb[0].mxu0
        %470 = vdwg.mxu0
        %471 = vmatprep.subr.mxu0 0.0
        %v472 = vand.u32 %v319, 4294901760
        %v473 = vsub.f32 %v319, %v472
        %v474 = vand.u32 %v473, 4294901760
        %v475 = vsub.f32 %v473, %v474
        %v476 = vand.u32 %v475, 4294901760
        %477 = vmatpush1.msra.mxu0 %v476
        %478 = vmatprep.subr.mxu0 0.0
        %v479 = vand.u32 %v320, 4294901760
        %v480 = vsub.f32 %v320, %v479
        %v481 = vand.u32 %v480, 4294901760
        %v482 = vsub.f32 %v480, %v481
        %v483 = vand.u32 %v482, 4294901760
        %484 = vmatpush1.msra.mxu0 %v483
        %485 = vmatprep.subr.mxu0 0.0
        %v486 = vand.u32 %v321, 4294901760
        %v487 = vsub.f32 %v321, %v486
        %v488 = vand.u32 %v487, 4294901760
        %v489 = vsub.f32 %v487, %v488
        %v490 = vand.u32 %v489, 4294901760
        %491 = vmatpush1.msra.mxu0 %v490
        %492 = vmatprep.subr.mxu0 0.0
        %493 = vmatpush1.msra.mxu0 0.0
        %494 = vmatprep.subr.mxu0 0.0
        %495 = vmatpush1.msra.mxu0 0.0
        %496 = vmatprep.subr.mxu0 0.0
        %497 = vmatpush1.msra.mxu0 0.0
        %498 = vmatprep.subr.mxu0 0.0
        %499 = vmatpush1.msra.mxu0 0.0
        %500 = vmatprep.subr.mxu0 0.0
        %501 = vmatpush1.msra.mxu0 0.0
        %502 = vmatprep.subr.mxu0 0.0
        %503 = vmatpush1.msra.mxu0 0.0
        %504 = vmatprep.subr.mxu0 0.0
        %505 = vmatpush1.msra.mxu0 0.0
        %506 = vmatprep.subr.mxu0 0.0
        %507 = vmatpush1.msra.mxu0 0.0
        %508 = vmatprep.subr.mxu0 0.0
        %509 = vmatpush1.msra.mxu0 0.0
        %510 = vmatprep.subr.mxu0 0.0
        %511 = vmatpush1.msra.mxu0 0.0
        %512 = vmatprep.subr.mxu0 0.0
        %513 = vmatpush1.msra.mxu0 0.0
        %514 = vmatprep.subr.mxu0 0.0
        %515 = vmatpush1.msra.mxu0 0.0
        %516 = vmatprep.subr.mxu0 0.0
        %517 = vmatpush1.msra.mxu0 0.0
        %518 = vmatprep.subr.mxu0 0.0
        %519 = vmatpush1.msra.mxu0 0.0
        %520 = vmatprep.subr.mxu0 0.0
        %521 = vmatpush1.msra.mxu0 0.0
        %522 = vmatprep.subr.mxu0 0.0
        %523 = vmatpush1.msra.mxu0 0.0
        %524 = vmatprep.subr.mxu0 0.0
        %525 = vmatpush1.msra.mxu0 0.0
        %526 = vmatprep.subr.mxu0 0.0
        %527 = vmatpush1.msra.mxu0 0.0
        %528 = vmatprep.subr.mxu0 0.0
        %529 = vmatpush1.msra.mxu0 0.0
        %530 = vmatprep.subr.mxu0 0.0
        %531 = vmatpush1.msra.mxu0 0.0
        %532 = vmatprep.subr.mxu0 0.0
        %533 = vmatpush1.msra.mxu0 0.0
        %534 = vmatprep.subr.mxu0 0.0
        %535 = vmatpush1.msra.mxu0 0.0
        %536 = vmatprep.subr.mxu0 0.0
        %537 = vmatpush1.msra.mxu0 0.0
        %538 = vmatprep.subr.mxu0 0.0
        %539 = vmatpush1.msra.mxu0 0.0
        %540 = vmatprep.subr.mxu0 0.0
        %541 = vmatpush1.msra.mxu0 0.0
        %542 = vmatprep.subr.mxu0 0.0
        %543 = vmatpush1.msra.mxu0 0.0
        %544 = vmatprep.subr.mxu0 0.0
        %545 = vmatpush1.msra.mxu0 0.0
        %546 = vmatprep.subr.mxu0 0.0
        %547 = vmatpush1.msra.mxu0 0.0
        %548 = vmatprep.subr.mxu0 0.0
        %549 = vmatpush1.msra.mxu0 0.0
        %550 = vmatprep.mubr.f32.mxu0 0.0
        %v551 = vand.u32 %v352, 4294901760
        %552 = vmatmul.mubr.f32.gmra.mrb[0].mxu0 %v551
        %v553 = vpop.f32.mrb[0].mxu0
        %v554 = vadd.f32 %v438, %v553
        %v555 = vpop.f32.mrb[0].mxu0
        %556 = vmatprep.mubr.f32.mxu0 0.0
        %v557 = vand.u32 %v355, 4294901760
        %558 = vmatmul.mubr.f32.gmra.mrb[0].mxu0 %v557
        %v559 = vpop.f32.mrb[0].mxu0
        %v560 = vadd.f32 %v448, %v559
        %v561 = vpop.f32.mrb[0].mxu0
        %562 = vmatprep.mubr.f32.mxu0 0.0
        %v563 = vand.u32 %v358, 4294901760
        %564 = vmatmul.mubr.f32.gmra.mrb[0].mxu0 %v563
        %v565 = vpop.f32.mrb[0].mxu0
        %v566 = vadd.f32 %v458, %v565
        %v567 = vpop.f32.mrb[0].mxu0
        %568 = vmatprep.mubr.f32.mxu0 0.0
        %v569 = vand.u32 %v361, 4294901760
        %570 = vmatmul.mubr.f32.gmra.mrb[0].mxu0 %v569
        %v571 = vpop.f32.mrb[0].mxu0
        %v572 = vadd.f32 %v468, %v571
        %v573 = vpop.f32.mrb[0].mxu0
        %574 = vdwg.mxu0
        %575 = vmatprep.subr.mxu0 0.0
        %v576 = vand.u32 %v319, 4294901760
        %v577 = vsub.f32 %v319, %v576
        %578 = vmatpush1.msra.mxu0 %v577
        %579 = vmatprep.subr.mxu0 0.0
        %v580 = vand.u32 %v320, 4294901760
        %v581 = vsub.f32 %v320, %v580
        %582 = vmatpush1.msra.mxu0 %v581
        %583 = vmatprep.subr.mxu0 0.0
        %v584 = vand.u32 %v321, 4294901760
        %v585 = vsub.f32 %v321, %v584
        %586 = vmatpush1.msra.mxu0 %v585
        %587 = vmatprep.subr.mxu0 0.0
        %588 = vmatpush1.msra.mxu0 0.0
        %589 = vmatprep.subr.mxu0 0.0
        %590 = vmatpush1.msra.mxu0 0.0
        %591 = vmatprep.subr.mxu0 0.0
        %592 = vmatpush1.msra.mxu0 0.0
        %593 = vmatprep.subr.mxu0 0.0
        %594 = vmatpush1.msra.mxu0 0.0
        %595 = vmatprep.subr.mxu0 0.0
        %596 = vmatpush1.msra.mxu0 0.0
        %597 = vmatprep.subr.mxu0 0.0
        %598 = vmatpush1.msra.mxu0 0.0
        %599 = vmatprep.subr.mxu0 0.0
        %600 = vmatpush1.msra.mxu0 0.0
        %601 = vmatprep.subr.mxu0 0.0
        %602 = vmatpush1.msra.mxu0 0.0
        %603 = vmatprep.subr.mxu0 0.0
        %604 = vmatpush1.msra.mxu0 0.0
        %605 = vmatprep.subr.mxu0 0.0
        %606 = vmatpush1.msra.mxu0 0.0
        %607 = vmatprep.subr.mxu0 0.0
        %608 = vmatpush1.msra.mxu0 0.0
        %609 = vmatprep.subr.mxu0 0.0
        %610 = vmatpush1.msra.mxu0 0.0
        %611 = vmatprep.subr.mxu0 0.0
        %612 = vmatpush1.msra.mxu0 0.0
        %613 = vmatprep.subr.mxu0 0.0
        %614 = vmatpush1.msra.mxu0 0.0
        %615 = vmatprep.subr.mxu0 0.0
        %616 = vmatpush1.msra.mxu0 0.0
        %617 = vmatprep.subr.mxu0 0.0
        %618 = vmatpush1.msra.mxu0 0.0
        %619 = vmatprep.subr.mxu0 0.0
        %620 = vmatpush1.msra.mxu0 0.0
        %621 = vmatprep.subr.mxu0 0.0
        %622 = vmatpush1.msra.mxu0 0.0
        %623 = vmatprep.subr.mxu0 0.0
        %624 = vmatpush1.msra.mxu0 0.0
        %625 = vmatprep.subr.mxu0 0.0
        %626 = vmatpush1.msra.mxu0 0.0
        %627 = vmatprep.subr.mxu0 0.0
        %628 = vmatpush1.msra.mxu0 0.0
        %629 = vmatprep.subr.mxu0 0.0
        %630 = vmatpush1.msra.mxu0 0.0
        %631 = vmatprep.subr.mxu0 0.0
        %632 = vmatpush1.msra.mxu0 0.0
        %633 = vmatprep.subr.mxu0 0.0
        %634 = vmatpush1.msra.mxu0 0.0
        %635 = vmatprep.subr.mxu0 0.0
        %636 = vmatpush1.msra.mxu0 0.0
        %637 = vmatprep.subr.mxu0 0.0
        %638 = vmatpush1.msra.mxu0 0.0
        %639 = vmatprep.subr.mxu0 0.0
        %640 = vmatpush1.msra.mxu0 0.0
        %641 = vmatprep.subr.mxu0 0.0
        %642 = vmatpush1.msra.mxu0 0.0
        %643 = vmatprep.subr.mxu0 0.0
        %644 = vmatpush1.msra.mxu0 0.0
        %645 = vmatprep.mubr.f32.mxu0 0.0
        %v646 = vand.u32 %v352, 4294901760
        %v647 = vsub.f32 %v352, %v646
        %648 = vmatmul.mubr.f32.gmra.mrb[0].mxu0 %v647
        %v649 = vpop.f32.mrb[0].mxu0
        %v650 = vadd.f32 %v554, %v649
        %v651 = vpop.f32.mrb[0].mxu0
        %652 = vmatprep.mubr.f32.mxu0 0.0
        %v653 = vand.u32 %v355, 4294901760
        %v654 = vsub.f32 %v355, %v653
        %655 = vmatmul.mubr.f32.gmra.mrb[0].mxu0 %v654
        %v656 = vpop.f32.mrb[0].mxu0
        %v657 = vadd.f32 %v560, %v656
        %v658 = vpop.f32.mrb[0].mxu0
        %659 = vmatprep.mubr.f32.mxu0 0.0
        %v660 = vand.u32 %v358, 4294901760
        %v661 = vsub.f32 %v358, %v660
        %662 = vmatmul.mubr.f32.gmra.mrb[0].mxu0 %v661
        %v663 = vpop.f32.mrb[0].mxu0
        %v664 = vadd.f32 %v566, %v663
        %v665 = vpop.f32.mrb[0].mxu0
        %666 = vmatprep.mubr.f32.mxu0 0.0
        %v667 = vand.u32 %v361, 4294901760
        %v668 = vsub.f32 %v361, %v667
        %669 = vmatmul.mubr.f32.gmra.mrb[0].mxu0 %v668
        %v670 = vpop.f32.mrb[0].mxu0
        %v671 = vadd.f32 %v572, %v670
        %v672 = vpop.f32.mrb[0].mxu0
        %673 = vdwg.mxu0
        %674 = vmatprep.subr.mxu0 0.0
        %v675 = vand.u32 %v319, 4294901760
        %676 = vmatpush1.msra.mxu0 %v675
        %677 = vmatprep.subr.mxu0 0.0
        %v678 = vand.u32 %v320, 4294901760
        %679 = vmatpush1.msra.mxu0 %v678
        %680 = vmatprep.subr.mxu0 0.0
        %v681 = vand.u32 %v321, 4294901760
        %682 = vmatpush1.msra.mxu0 %v681
        %683 = vmatprep.subr.mxu0 0.0
        %684 = vmatpush1.msra.mxu0 0.0
        %685 = vmatprep.subr.mxu0 0.0
        %686 = vmatpush1.msra.mxu0 0.0
        %687 = vmatprep.subr.mxu0 0.0
        %688 = vmatpush1.msra.mxu0 0.0
        %689 = vmatprep.subr.mxu0 0.0
        %690 = vmatpush1.msra.mxu0 0.0
        %691 = vmatprep.subr.mxu0 0.0
        %692 = vmatpush1.msra.mxu0 0.0
        %693 = vmatprep.subr.mxu0 0.0
        %694 = vmatpush1.msra.mxu0 0.0
        %695 = vmatprep.subr.mxu0 0.0
        %696 = vmatpush1.msra.mxu0 0.0
        %697 = vmatprep.subr.mxu0 0.0
        %698 = vmatpush1.msra.mxu0 0.0
        %699 = vmatprep.subr.mxu0 0.0
        %700 = vmatpush1.msra.mxu0 0.0
        %701 = vmatprep.subr.mxu0 0.0
        %702 = vmatpush1.msra.mxu0 0.0
        %703 = vmatprep.subr.mxu0 0.0
        %704 = vmatpush1.msra.mxu0 0.0
        %705 = vmatprep.subr.mxu0 0.0
        %706 = vmatpush1.msra.mxu0 0.0
        %707 = vmatprep.subr.mxu0 0.0
        %708 = vmatpush1.msra.mxu0 0.0
        %709 = vmatprep.subr.mxu0 0.0
        %710 = vmatpush1.msra.mxu0 0.0
        %711 = vmatprep.subr.mxu0 0.0
        %712 = vmatpush1.msra.mxu0 0.0
        %713 = vmatprep.subr.mxu0 0.0
        %714 = vmatpush1.msra.mxu0 0.0
        %715 = vmatprep.subr.mxu0 0.0
        %716 = vmatpush1.msra.mxu0 0.0
        %717 = vmatprep.subr.mxu0 0.0
        %718 = vmatpush1.msra.mxu0 0.0
        %719 = vmatprep.subr.mxu0 0.0
        %720 = vmatpush1.msra.mxu0 0.0
        %721 = vmatprep.subr.mxu0 0.0
        %722 = vmatpush1.msra.mxu0 0.0
        %723 = vmatprep.subr.mxu0 0.0
        %724 = vmatpush1.msra.mxu0 0.0
        %725 = vmatprep.subr.mxu0 0.0
        %726 = vmatpush1.msra.mxu0 0.0
        %727 = vmatprep.subr.mxu0 0.0
        %728 = vmatpush1.msra.mxu0 0.0
        %729 = vmatprep.subr.mxu0 0.0
        %730 = vmatpush1.msra.mxu0 0.0
        %731 = vmatprep.subr.mxu0 0.0
        %732 = vmatpush1.msra.mxu0 0.0
        %733 = vmatprep.subr.mxu0 0.0
        %734 = vmatpush1.msra.mxu0 0.0
        %735 = vmatprep.subr.mxu0 0.0
        %736 = vmatpush1.msra.mxu0 0.0
        %737 = vmatprep.subr.mxu0 0.0
        %738 = vmatpush1.msra.mxu0 0.0
        %739 = vmatprep.subr.mxu0 0.0
        %740 = vmatpush1.msra.mxu0 0.0
        %741 = vmatprep.mubr.f32.mxu0 0.0
        %v742 = vand.u32 %v352, 4294901760
        %v743 = vsub.f32 %v352, %v742
        %v744 = vand.u32 %v743, 4294901760
        %745 = vmatmul.mubr.f32.gmra.mrb[0].mxu0 %v744
        %v746 = vpop.f32.mrb[0].mxu0
        %v747 = vadd.f32 %v650, %v746
        %v748 = vpop.f32.mrb[0].mxu0
        %749 = vmatprep.mubr.f32.mxu0 0.0
        %v750 = vand.u32 %v355, 4294901760
        %v751 = vsub.f32 %v355, %v750
        %v752 = vand.u32 %v751, 4294901760
        %753 = vmatmul.mubr.f32.gmra.mrb[0].mxu0 %v752
        %v754 = vpop.f32.mrb[0].mxu0
        %v755 = vadd.f32 %v657, %v754
        %v756 = vpop.f32.mrb[0].mxu0
        %757 = vmatprep.mubr.f32.mxu0 0.0
        %v758 = vand.u32 %v358, 4294901760
        %v759 = vsub.f32 %v358, %v758
        %v760 = vand.u32 %v759, 4294901760
        %761 = vmatmul.mubr.f32.gmra.mrb[0].mxu0 %v760
        %v762 = vpop.f32.mrb[0].mxu0
        %v763 = vadd.f32 %v664, %v762
        %v764 = vpop.f32.mrb[0].mxu0
        %765 = vmatprep.mubr.f32.mxu0 0.0
        %v766 = vand.u32 %v361, 4294901760
        %v767 = vsub.f32 %v361, %v766
        %v768 = vand.u32 %v767, 4294901760
        %769 = vmatmul.mubr.f32.gmra.mrb[0].mxu0 %v768
        %v770 = vpop.f32.mrb[0].mxu0
        %v771 = vadd.f32 %v671, %v770
        %v772 = vpop.f32.mrb[0].mxu0
        %773 = vdwg.mxu0
        %774 = vmatprep.subr.mxu0 0.0
        %v775 = vand.u32 %v319, 4294901760
        %v776 = vsub.f32 %v319, %v775
        %v777 = vand.u32 %v776, 4294901760
        %778 = vmatpush1.msra.mxu0 %v777
        %779 = vmatprep.subr.mxu0 0.0
        %v780 = vand.u32 %v320, 4294901760
        %v781 = vsub.f32 %v320, %v780
        %v782 = vand.u32 %v781, 4294901760
        %783 = vmatpush1.msra.mxu0 %v782
        %784 = vmatprep.subr.mxu0 0.0
        %v785 = vand.u32 %v321, 4294901760
        %v786 = vsub.f32 %v321, %v785
        %v787 = vand.u32 %v786, 4294901760
        %788 = vmatpush1.msra.mxu0 %v787
        %789 = vmatprep.subr.mxu0 0.0
        %790 = vmatpush1.msra.mxu0 0.0
        %791 = vmatprep.subr.mxu0 0.0
        %792 = vmatpush1.msra.mxu0 0.0
        %793 = vmatprep.subr.mxu0 0.0
        %794 = vmatpush1.msra.mxu0 0.0
        %795 = vmatprep.subr.mxu0 0.0
        %796 = vmatpush1.msra.mxu0 0.0
        %797 = vmatprep.subr.mxu0 0.0
        %798 = vmatpush1.msra.mxu0 0.0
        %799 = vmatprep.subr.mxu0 0.0
        %800 = vmatpush1.msra.mxu0 0.0
        %801 = vmatprep.subr.mxu0 0.0
        %802 = vmatpush1.msra.mxu0 0.0
        %803 = vmatprep.subr.mxu0 0.0
        %804 = vmatpush1.msra.mxu0 0.0
        %805 = vmatprep.subr.mxu0 0.0
        %806 = vmatpush1.msra.mxu0 0.0
        %807 = vmatprep.subr.mxu0 0.0
        %808 = vmatpush1.msra.mxu0 0.0
        %809 = vmatprep.subr.mxu0 0.0
        %810 = vmatpush1.msra.mxu0 0.0
        %811 = vmatprep.subr.mxu0 0.0
        %812 = vmatpush1.msra.mxu0 0.0
        %813 = vmatprep.subr.mxu0 0.0
        %814 = vmatpush1.msra.mxu0 0.0
        %815 = vmatprep.subr.mxu0 0.0
        %816 = vmatpush1.msra.mxu0 0.0
        %817 = vmatprep.subr.mxu0 0.0
        %818 = vmatpush1.msra.mxu0 0.0
        %819 = vmatprep.subr.mxu0 0.0
        %820 = vmatpush1.msra.mxu0 0.0
        %821 = vmatprep.subr.mxu0 0.0
        %822 = vmatpush1.msra.mxu0 0.0
        %823 = vmatprep.subr.mxu0 0.0
        %824 = vmatpush1.msra.mxu0 0.0
        %825 = vmatprep.subr.mxu0 0.0
        %826 = vmatpush1.msra.mxu0 0.0
        %827 = vmatprep.subr.mxu0 0.0
        %828 = vmatpush1.msra.mxu0 0.0
        %829 = vmatprep.subr.mxu0 0.0
        %830 = vmatpush1.msra.mxu0 0.0
        %831 = vmatprep.subr.mxu0 0.0
        %832 = vmatpush1.msra.mxu0 0.0
        %833 = vmatprep.subr.mxu0 0.0
        %834 = vmatpush1.msra.mxu0 0.0
        %835 = vmatprep.subr.mxu0 0.0
        %836 = vmatpush1.msra.mxu0 0.0
        %837 = vmatprep.subr.mxu0 0.0
        %838 = vmatpush1.msra.mxu0 0.0
        %839 = vmatprep.subr.mxu0 0.0
        %840 = vmatpush1.msra.mxu0 0.0
        %841 = vmatprep.subr.mxu0 0.0
        %842 = vmatpush1.msra.mxu0 0.0
        %843 = vmatprep.subr.mxu0 0.0
        %844 = vmatpush1.msra.mxu0 0.0
        %845 = vmatprep.subr.mxu0 0.0
        %846 = vmatpush1.msra.mxu0 0.0
        %847 = vmatprep.mubr.f32.mxu0 0.0
        %v848 = vand.u32 %v352, 4294901760
        %849 = vmatmul.mubr.f32.gmra.mrb[0].mxu0 %v848
        %v850 = vpop.f32.mrb[0].mxu0
        %v851 = vadd.f32 %v747, %v850
        %v852 = vpop.f32.mrb[0].mxu0
        %853 = vmatprep.mubr.f32.mxu0 0.0
        %v854 = vand.u32 %v355, 4294901760
        %855 = vmatmul.mubr.f32.gmra.mrb[0].mxu0 %v854
        %v856 = vpop.f32.mrb[0].mxu0
        %v857 = vadd.f32 %v755, %v856
        %v858 = vpop.f32.mrb[0].mxu0
        %859 = vmatprep.mubr.f32.mxu0 0.0
        %v860 = vand.u32 %v358, 4294901760
        %861 = vmatmul.mubr.f32.gmra.mrb[0].mxu0 %v860
        %v862 = vpop.f32.mrb[0].mxu0
        %v863 = vadd.f32 %v763, %v862
        %v864 = vpop.f32.mrb[0].mxu0
        %865 = vmatprep.mubr.f32.mxu0 0.0
        %v866 = vand.u32 %v361, 4294901760
        %867 = vmatmul.mubr.f32.gmra.mrb[0].mxu0 %v866
        %v868 = vpop.f32.mrb[0].mxu0
        %v869 = vadd.f32 %v771, %v868
        %v870 = vpop.f32.mrb[0].mxu0
        %871 = vdwg.mxu0
        %872 = vmatprep.subr.mxu0 0.0
        %v873 = vand.u32 %v319, 4294901760
        %874 = vmatpush1.msra.mxu0 %v873
        %875 = vmatprep.subr.mxu0 0.0
        %v876 = vand.u32 %v320, 4294901760
        %877 = vmatpush1.msra.mxu0 %v876
        %878 = vmatprep.subr.mxu0 0.0
        %v879 = vand.u32 %v321, 4294901760
        %880 = vmatpush1.msra.mxu0 %v879
        %881 = vmatprep.subr.mxu0 0.0
        %882 = vmatpush1.msra.mxu0 0.0
        %883 = vmatprep.subr.mxu0 0.0
        %884 = vmatpush1.msra.mxu0 0.0
        %885 = vmatprep.subr.mxu0 0.0
        %886 = vmatpush1.msra.mxu0 0.0
        %887 = vmatprep.subr.mxu0 0.0
        %888 = vmatpush1.msra.mxu0 0.0
        %889 = vmatprep.subr.mxu0 0.0
        %890 = vmatpush1.msra.mxu0 0.0
        %891 = vmatprep.subr.mxu0 0.0
        %892 = vmatpush1.msra.mxu0 0.0
        %893 = vmatprep.subr.mxu0 0.0
        %894 = vmatpush1.msra.mxu0 0.0
        %895 = vmatprep.subr.mxu0 0.0
        %896 = vmatpush1.msra.mxu0 0.0
        %897 = vmatprep.subr.mxu0 0.0
        %898 = vmatpush1.msra.mxu0 0.0
        %899 = vmatprep.subr.mxu0 0.0
        %900 = vmatpush1.msra.mxu0 0.0
        %901 = vmatprep.subr.mxu0 0.0
        %902 = vmatpush1.msra.mxu0 0.0
        %903 = vmatprep.subr.mxu0 0.0
        %904 = vmatpush1.msra.mxu0 0.0
        %905 = vmatprep.subr.mxu0 0.0
        %906 = vmatpush1.msra.mxu0 0.0
        %907 = vmatprep.subr.mxu0 0.0
        %908 = vmatpush1.msra.mxu0 0.0
        %909 = vmatprep.subr.mxu0 0.0
        %910 = vmatpush1.msra.mxu0 0.0
        %911 = vmatprep.subr.mxu0 0.0
        %912 = vmatpush1.msra.mxu0 0.0
        %913 = vmatprep.subr.mxu0 0.0
        %914 = vmatpush1.msra.mxu0 0.0
        %915 = vmatprep.subr.mxu0 0.0
        %916 = vmatpush1.msra.mxu0 0.0
        %917 = vmatprep.subr.mxu0 0.0
        %918 = vmatpush1.msra.mxu0 0.0
        %919 = vmatprep.subr.mxu0 0.0
        %920 = vmatpush1.msra.mxu0 0.0
        %921 = vmatprep.subr.mxu0 0.0
        %922 = vmatpush1.msra.mxu0 0.0
        %923 = vmatprep.subr.mxu0 0.0
        %924 = vmatpush1.msra.mxu0 0.0
        %925 = vmatprep.subr.mxu0 0.0
        %926 = vmatpush1.msra.mxu0 0.0
        %927 = vmatprep.subr.mxu0 0.0
        %928 = vmatpush1.msra.mxu0 0.0
        %929 = vmatprep.subr.mxu0 0.0
        %930 = vmatpush1.msra.mxu0 0.0
        %931 = vmatprep.subr.mxu0 0.0
        %932 = vmatpush1.msra.mxu0 0.0
        %933 = vmatprep.subr.mxu0 0.0
        %934 = vmatpush1.msra.mxu0 0.0
        %935 = vmatprep.subr.mxu0 0.0
        %936 = vmatpush1.msra.mxu0 0.0
        %937 = vmatprep.subr.mxu0 0.0
        %938 = vmatpush1.msra.mxu0 0.0
        %939 = vmatprep.mubr.f32.mxu0 0.0
        %v940 = vand.u32 %v352, 4294901760
        %941 = vmatmul.mubr.f32.gmra.mrb[0].mxu0 %v940
        %v942 = vpop.f32.mrb[0].mxu0
        %v943 = vadd.f32 %v851, %v942
        %v944 = vpop.f32.mrb[0].mxu0
        %945 = vmatprep.mubr.f32.mxu0 0.0
        %v946 = vand.u32 %v355, 4294901760
        %947 = vmatmul.mubr.f32.gmra.mrb[0].mxu0 %v946
        %v948 = vpop.f32.mrb[0].mxu0
        %v949 = vadd.f32 %v857, %v948
        %v950 = vpop.f32.mrb[0].mxu0
        %951 = vmatprep.mubr.f32.mxu0 0.0
        %v952 = vand.u32 %v358, 4294901760
        %953 = vmatmul.mubr.f32.gmra.mrb[0].mxu0 %v952
        %v954 = vpop.f32.mrb[0].mxu0
        %v955 = vadd.f32 %v863, %v954
        %v956 = vpop.f32.mrb[0].mxu0
        %957 = vmatprep.mubr.f32.mxu0 0.0
        %v958 = vand.u32 %v361, 4294901760
        %959 = vmatmul.mubr.f32.gmra.mrb[0].mxu0 %v958
        %v960 = vpop.f32.mrb[0].mxu0
        %v961 = vadd.f32 %v869, %v960
        %v962 = vpop.f32.mrb[0].mxu0
        %963 = vdwg.mxu0
        %v964 = vmax.f32 %v943, 0.0
        %v965 = vmax.f32 %v949, 0.0
        %v966 = vmax.f32 %v955, 0.0
        %v967 = vmax.f32 %v961, 0.0
        %v968 = vld [vmem:[%s3] sm:$0xff]
        %v969 = vld [vmem:[%s3 + $0x8] sm:$0xff]
        %v970 = vld [vmem:[%s3 + $0x10] sm:$0xff]
        %v971 = vld [vmem:[%s3 + $0x18] sm:$0xff]
        %v972 = vld [vmem:[%s4] sm:$0xff]
        %v973 = vld [vmem:[%s4 + $0x8] sm:$0xff]
        %v974 = vld [vmem:[%s4 + $0x10] sm:$0xff]
        %v975 = vld [vmem:[%s4 + $0x18] sm:$0xff]
        %977 = vset.pattern.permute.xlu0 0
        %978 = vperm.xlu0 %977, %v972
        %v979 = vpop.permute.xlu0 %978
        %982 = vset.pattern.permute.xlu0 0
        %983 = vperm.xlu0 %982, %v973
        %v984 = vpop.permute.xlu0 %983
        %987 = vset.pattern.permute.xlu0 0
        %988 = vperm.xlu0 %987, %v974
        %v989 = vpop.permute.xlu0 %988
        %992 = vset.pattern.permute.xlu0 0
        %993 = vperm.xlu0 %992, %v975
        %v994 = vpop.permute.xlu0 %993
        %vm996 = vcmask 261120
        %v998 = vsel %vm996, %v968, 0
        %v1001 = vsel %vm996, %v969, 0
        %v1004 = vsel %vm996, %v970, 0
        %v1007 = vsel %vm996, %v971, 0
        %1009 = vmatprep.subr.mxu0 0.0
        %v1010 = vand.u32 %v964, 4294901760
        %1011 = vmatpush1.msra.mxu0 %v1010
        %1012 = vmatprep.subr.mxu0 0.0
        %v1013 = vand.u32 %v965, 4294901760
        %1014 = vmatpush1.msra.mxu0 %v1013
        %1015 = vmatprep.subr.mxu0 0.0
        %v1016 = vand.u32 %v966, 4294901760
        %1017 = vmatpush1.msra.mxu0 %v1016
        %1018 = vmatprep.subr.mxu0 0.0
        %v1019 = vand.u32 %v967, 4294901760
        %1020 = vmatpush1.msra.mxu0 %v1019
        %1021 = vmatprep.subr.mxu0 0.0
        %1022 = vmatpush1.msra.mxu0 0.0
        %1023 = vmatprep.subr.mxu0 0.0
        %1024 = vmatpush1.msra.mxu0 0.0
        %1025 = vmatprep.subr.mxu0 0.0
        %1026 = vmatpush1.msra.mxu0 0.0
        %1027 = vmatprep.subr.mxu0 0.0
        %1028 = vmatpush1.msra.mxu0 0.0
        %1029 = vmatprep.subr.mxu0 0.0
        %1030 = vmatpush1.msra.mxu0 0.0
        %1031 = vmatprep.subr.mxu0 0.0
        %1032 = vmatpush1.msra.mxu0 0.0
        %1033 = vmatprep.subr.mxu0 0.0
        %1034 = vmatpush1.msra.mxu0 0.0
        %1035 = vmatprep.subr.mxu0 0.0
        %1036 = vmatpush1.msra.mxu0 0.0
        %1037 = vmatprep.subr.mxu0 0.0
        %1038 = vmatpush1.msra.mxu0 0.0
        %1039 = vmatprep.subr.mxu0 0.0
        %1040 = vmatpush1.msra.mxu0 0.0
        %1041 = vmatprep.subr.mxu0 0.0
        %1042 = vmatpush1.msra.mxu0 0.0
        %1043 = vmatprep.subr.mxu0 0.0
        %1044 = vmatpush1.msra.mxu0 0.0
        %1045 = vmatprep.subr.mxu0 0.0
        %1046 = vmatpush1.msra.mxu0 0.0
        %1047 = vmatprep.subr.mxu0 0.0
        %1048 = vmatpush1.msra.mxu0 0.0
        %1049 = vmatprep.subr.mxu0 0.0
        %1050 = vmatpush1.msra.mxu0 0.0
        %1051 = vmatprep.subr.mxu0 0.0
        %1052 = vmatpush1.msra.mxu0 0.0
        %1053 = vmatprep.subr.mxu0 0.0
        %1054 = vmatpush1.msra.mxu0 0.0
        %1055 = vmatprep.subr.mxu0 0.0
        %1056 = vmatpush1.msra.mxu0 0.0
        %1057 = vmatprep.subr.mxu0 0.0
        %1058 = vmatpush1.msra.mxu0 0.0
        %1059 = vmatprep.subr.mxu0 0.0
        %1060 = vmatpush1.msra.mxu0 0.0
        %1061 = vmatprep.subr.mxu0 0.0
        %1062 = vmatpush1.msra.mxu0 0.0
        %1063 = vmatprep.subr.mxu0 0.0
        %1064 = vmatpush1.msra.mxu0 0.0
        %1065 = vmatprep.subr.mxu0 0.0
        %1066 = vmatpush1.msra.mxu0 0.0
        %1067 = vmatprep.subr.mxu0 0.0
        %1068 = vmatpush1.msra.mxu0 0.0
        %1069 = vmatprep.subr.mxu0 0.0
        %1070 = vmatpush1.msra.mxu0 0.0
        %1071 = vmatprep.subr.mxu0 0.0
        %1072 = vmatpush1.msra.mxu0 0.0
        %1073 = vmatprep.subr.mxu0 0.0
        %1074 = vmatpush1.msra.mxu0 0.0
        %1075 = vmatprep.subr.mxu0 0.0
        %1076 = vmatpush1.msra.mxu0 0.0
        %1077 = vmatprep.mubr.f32.mxu0 0.0
        %v1078 = vand.u32 %v998, 4294901760
        %v1079 = vsub.f32 %v998, %v1078
        %v1080 = vand.u32 %v1079, 4294901760
        %v1081 = vsub.f32 %v1079, %v1080
        %v1082 = vand.u32 %v1081, 4294901760
        %1083 = vmatmul.mubr.f32.gmra.mrb[0].mxu0 %v1082
        %v1084 = vpop.f32.mrb[0].mxu0
        %v1085 = vadd.f32 %v979, %v1084
        %v1086 = vpop.f32.mrb[0].mxu0
        %1087 = vmatprep.mubr.f32.mxu0 0.0
        %v1088 = vand.u32 %v1001, 4294901760
        %v1089 = vsub.f32 %v1001, %v1088
        %v1090 = vand.u32 %v1089, 4294901760
        %v1091 = vsub.f32 %v1089, %v1090
        %v1092 = vand.u32 %v1091, 4294901760
        %1093 = vmatmul.mubr.f32.gmra.mrb[0].mxu0 %v1092
        %v1094 = vpop.f32.mrb[0].mxu0
        %v1095 = vadd.f32 %v984, %v1094
        %v1096 = vpop.f32.mrb[0].mxu0
        %1097 = vmatprep.mubr.f32.mxu0 0.0
        %v1098 = vand.u32 %v1004, 4294901760
        %v1099 = vsub.f32 %v1004, %v1098
        %v1100 = vand.u32 %v1099, 4294901760
        %v1101 = vsub.f32 %v1099, %v1100
        %v1102 = vand.u32 %v1101, 4294901760
        %1103 = vmatmul.mubr.f32.gmra.mrb[0].mxu0 %v1102
        %v1104 = vpop.f32.mrb[0].mxu0
        %v1105 = vadd.f32 %v989, %v1104
        %v1106 = vpop.f32.mrb[0].mxu0
        %1107 = vmatprep.mubr.f32.mxu0 0.0
        %v1108 = vand.u32 %v1007, 4294901760
        %v1109 = vsub.f32 %v1007, %v1108
        %v1110 = vand.u32 %v1109, 4294901760
        %v1111 = vsub.f32 %v1109, %v1110
        %v1112 = vand.u32 %v1111, 4294901760
        %1113 = vmatmul.mubr.f32.gmra.mrb[0].mxu0 %v1112
        %v1114 = vpop.f32.mrb[0].mxu0
        %v1115 = vadd.f32 %v994, %v1114
        %v1116 = vpop.f32.mrb[0].mxu0
        %1117 = vdwg.mxu0
        %1118 = vmatprep.subr.mxu0 0.0
        %v1119 = vand.u32 %v964, 4294901760
        %v1120 = vsub.f32 %v964, %v1119
        %v1121 = vand.u32 %v1120, 4294901760
        %v1122 = vsub.f32 %v1120, %v1121
        %v1123 = vand.u32 %v1122, 4294901760
        %1124 = vmatpush1.msra.mxu0 %v1123
        %1125 = vmatprep.subr.mxu0 0.0
        %v1126 = vand.u32 %v965, 4294901760
        %v1127 = vsub.f32 %v965, %v1126
        %v1128 = vand.u32 %v1127, 4294901760
        %v1129 = vsub.f32 %v1127, %v1128
        %v1130 = vand.u32 %v1129, 4294901760
        %1131 = vmatpush1.msra.mxu0 %v1130
        %1132 = vmatprep.subr.mxu0 0.0
        %v1133 = vand.u32 %v966, 4294901760
        %v1134 = vsub.f32 %v966, %v1133
        %v1135 = vand.u32 %v1134, 4294901760
        %v1136 = vsub.f32 %v1134, %v1135
        %v1137 = vand.u32 %v1136, 4294901760
        %1138 = vmatpush1.msra.mxu0 %v1137
        %1139 = vmatprep.subr.mxu0 0.0
        %v1140 = vand.u32 %v967, 4294901760
        %v1141 = vsub.f32 %v967, %v1140
        %v1142 = vand.u32 %v1141, 4294901760
        %v1143 = vsub.f32 %v1141, %v1142
        %v1144 = vand.u32 %v1143, 4294901760
        %1145 = vmatpush1.msra.mxu0 %v1144
        %1146 = vmatprep.subr.mxu0 0.0
        %1147 = vmatpush1.msra.mxu0 0.0
        %1148 = vmatprep.subr.mxu0 0.0
        %1149 = vmatpush1.msra.mxu0 0.0
        %1150 = vmatprep.subr.mxu0 0.0
        %1151 = vmatpush1.msra.mxu0 0.0
        %1152 = vmatprep.subr.mxu0 0.0
        %1153 = vmatpush1.msra.mxu0 0.0
        %1154 = vmatprep.subr.mxu0 0.0
        %1155 = vmatpush1.msra.mxu0 0.0
        %1156 = vmatprep.subr.mxu0 0.0
        %1157 = vmatpush1.msra.mxu0 0.0
        %1158 = vmatprep.subr.mxu0 0.0
        %1159 = vmatpush1.msra.mxu0 0.0
        %1160 = vmatprep.subr.mxu0 0.0
        %1161 = vmatpush1.msra.mxu0 0.0
        %1162 = vmatprep.subr.mxu0 0.0
        %1163 = vmatpush1.msra.mxu0 0.0
        %1164 = vmatprep.subr.mxu0 0.0
        %1165 = vmatpush1.msra.mxu0 0.0
        %1166 = vmatprep.subr.mxu0 0.0
        %1167 = vmatpush1.msra.mxu0 0.0
        %1168 = vmatprep.subr.mxu0 0.0
        %1169 = vmatpush1.msra.mxu0 0.0
        %1170 = vmatprep.subr.mxu0 0.0
        %1171 = vmatpush1.msra.mxu0 0.0
        %1172 = vmatprep.subr.mxu0 0.0
        %1173 = vmatpush1.msra.mxu0 0.0
        %1174 = vmatprep.subr.mxu0 0.0
        %1175 = vmatpush1.msra.mxu0 0.0
        %1176 = vmatprep.subr.mxu0 0.0
        %1177 = vmatpush1.msra.mxu0 0.0
        %1178 = vmatprep.subr.mxu0 0.0
        %1179 = vmatpush1.msra.mxu0 0.0
        %1180 = vmatprep.subr.mxu0 0.0
        %1181 = vmatpush1.msra.mxu0 0.0
        %1182 = vmatprep.subr.mxu0 0.0
        %1183 = vmatpush1.msra.mxu0 0.0
        %1184 = vmatprep.subr.mxu0 0.0
        %1185 = vmatpush1.msra.mxu0 0.0
        %1186 = vmatprep.subr.mxu0 0.0
        %1187 = vmatpush1.msra.mxu0 0.0
        %1188 = vmatprep.subr.mxu0 0.0
        %1189 = vmatpush1.msra.mxu0 0.0
        %1190 = vmatprep.subr.mxu0 0.0
        %1191 = vmatpush1.msra.mxu0 0.0
        %1192 = vmatprep.subr.mxu0 0.0
        %1193 = vmatpush1.msra.mxu0 0.0
        %1194 = vmatprep.subr.mxu0 0.0
        %1195 = vmatpush1.msra.mxu0 0.0
        %1196 = vmatprep.subr.mxu0 0.0
        %1197 = vmatpush1.msra.mxu0 0.0
        %1198 = vmatprep.subr.mxu0 0.0
        %1199 = vmatpush1.msra.mxu0 0.0
        %1200 = vmatprep.subr.mxu0 0.0
        %1201 = vmatpush1.msra.mxu0 0.0
        %1202 = vmatprep.mubr.f32.mxu0 0.0
        %v1203 = vand.u32 %v998, 4294901760
        %1204 = vmatmul.mubr.f32.gmra.mrb[0].mxu0 %v1203
        %v1205 = vpop.f32.mrb[0].mxu0
        %v1206 = vadd.f32 %v1085, %v1205
        %v1207 = vpop.f32.mrb[0].mxu0
        %1208 = vmatprep.mubr.f32.mxu0 0.0
        %v1209 = vand.u32 %v1001, 4294901760
        %1210 = vmatmul.mubr.f32.gmra.mrb[0].mxu0 %v1209
        %v1211 = vpop.f32.mrb[0].mxu0
        %v1212 = vadd.f32 %v1095, %v1211
        %v1213 = vpop.f32.mrb[0].mxu0
        %1214 = vmatprep.mubr.f32.mxu0 0.0
        %v1215 = vand.u32 %v1004, 4294901760
        %1216 = vmatmul.mubr.f32.gmra.mrb[0].mxu0 %v1215
        %v1217 = vpop.f32.mrb[0].mxu0
        %v1218 = vadd.f32 %v1105, %v1217
        %v1219 = vpop.f32.mrb[0].mxu0
        %1220 = vmatprep.mubr.f32.mxu0 0.0
        %v1221 = vand.u32 %v1007, 4294901760
        %1222 = vmatmul.mubr.f32.gmra.mrb[0].mxu0 %v1221
        %v1223 = vpop.f32.mrb[0].mxu0
        %v1224 = vadd.f32 %v1115, %v1223
        %v1225 = vpop.f32.mrb[0].mxu0
        %1226 = vdwg.mxu0
        %1227 = vmatprep.subr.mxu0 0.0
        %v1228 = vand.u32 %v964, 4294901760
        %v1229 = vsub.f32 %v964, %v1228
        %1230 = vmatpush1.msra.mxu0 %v1229
        %1231 = vmatprep.subr.mxu0 0.0
        %v1232 = vand.u32 %v965, 4294901760
        %v1233 = vsub.f32 %v965, %v1232
        %1234 = vmatpush1.msra.mxu0 %v1233
        %1235 = vmatprep.subr.mxu0 0.0
        %v1236 = vand.u32 %v966, 4294901760
        %v1237 = vsub.f32 %v966, %v1236
        %1238 = vmatpush1.msra.mxu0 %v1237
        %1239 = vmatprep.subr.mxu0 0.0
        %v1240 = vand.u32 %v967, 4294901760
        %v1241 = vsub.f32 %v967, %v1240
        %1242 = vmatpush1.msra.mxu0 %v1241
        %1243 = vmatprep.subr.mxu0 0.0
        %1244 = vmatpush1.msra.mxu0 0.0
        %1245 = vmatprep.subr.mxu0 0.0
        %1246 = vmatpush1.msra.mxu0 0.0
        %1247 = vmatprep.subr.mxu0 0.0
        %1248 = vmatpush1.msra.mxu0 0.0
        %1249 = vmatprep.subr.mxu0 0.0
        %1250 = vmatpush1.msra.mxu0 0.0
        %1251 = vmatprep.subr.mxu0 0.0
        %1252 = vmatpush1.msra.mxu0 0.0
        %1253 = vmatprep.subr.mxu0 0.0
        %1254 = vmatpush1.msra.mxu0 0.0
        %1255 = vmatprep.subr.mxu0 0.0
        %1256 = vmatpush1.msra.mxu0 0.0
        %1257 = vmatprep.subr.mxu0 0.0
        %1258 = vmatpush1.msra.mxu0 0.0
        %1259 = vmatprep.subr.mxu0 0.0
        %1260 = vmatpush1.msra.mxu0 0.0
        %1261 = vmatprep.subr.mxu0 0.0
        %1262 = vmatpush1.msra.mxu0 0.0
        %1263 = vmatprep.subr.mxu0 0.0
        %1264 = vmatpush1.msra.mxu0 0.0
        %1265 = vmatprep.subr.mxu0 0.0
        %1266 = vmatpush1.msra.mxu0 0.0
        %1267 = vmatprep.subr.mxu0 0.0
        %1268 = vmatpush1.msra.mxu0 0.0
        %1269 = vmatprep.subr.mxu0 0.0
        %1270 = vmatpush1.msra.mxu0 0.0
        %1271 = vmatprep.subr.mxu0 0.0
        %1272 = vmatpush1.msra.mxu0 0.0
        %1273 = vmatprep.subr.mxu0 0.0
        %1274 = vmatpush1.msra.mxu0 0.0
        %1275 = vmatprep.subr.mxu0 0.0
        %1276 = vmatpush1.msra.mxu0 0.0
        %1277 = vmatprep.subr.mxu0 0.0
        %1278 = vmatpush1.msra.mxu0 0.0
        %1279 = vmatprep.subr.mxu0 0.0
        %1280 = vmatpush1.msra.mxu0 0.0
        %1281 = vmatprep.subr.mxu0 0.0
        %1282 = vmatpush1.msra.mxu0 0.0
        %1283 = vmatprep.subr.mxu0 0.0
        %1284 = vmatpush1.msra.mxu0 0.0
        %1285 = vmatprep.subr.mxu0 0.0
        %1286 = vmatpush1.msra.mxu0 0.0
        %1287 = vmatprep.subr.mxu0 0.0
        %1288 = vmatpush1.msra.mxu0 0.0
        %1289 = vmatprep.subr.mxu0 0.0
        %1290 = vmatpush1.msra.mxu0 0.0
        %1291 = vmatprep.subr.mxu0 0.0
        %1292 = vmatpush1.msra.mxu0 0.0
        %1293 = vmatprep.subr.mxu0 0.0
        %1294 = vmatpush1.msra.mxu0 0.0
        %1295 = vmatprep.subr.mxu0 0.0
        %1296 = vmatpush1.msra.mxu0 0.0
        %1297 = vmatprep.subr.mxu0 0.0
        %1298 = vmatpush1.msra.mxu0 0.0
        %1299 = vmatprep.mubr.f32.mxu0 0.0
        %v1300 = vand.u32 %v998, 4294901760
        %v1301 = vsub.f32 %v998, %v1300
        %1302 = vmatmul.mubr.f32.gmra.mrb[0].mxu0 %v1301
        %v1303 = vpop.f32.mrb[0].mxu0
        %v1304 = vadd.f32 %v1206, %v1303
        %v1305 = vpop.f32.mrb[0].mxu0
        %1306 = vmatprep.mubr.f32.mxu0 0.0
        %v1307 = vand.u32 %v1001, 4294901760
        %v1308 = vsub.f32 %v1001, %v1307
        %1309 = vmatmul.mubr.f32.gmra.mrb[0].mxu0 %v1308
        %v1310 = vpop.f32.mrb[0].mxu0
        %v1311 = vadd.f32 %v1212, %v1310
        %v1312 = vpop.f32.mrb[0].mxu0
        %1313 = vmatprep.mubr.f32.mxu0 0.0
        %v1314 = vand.u32 %v1004, 4294901760
        %v1315 = vsub.f32 %v1004, %v1314
        %1316 = vmatmul.mubr.f32.gmra.mrb[0].mxu0 %v1315
        %v1317 = vpop.f32.mrb[0].mxu0
        %v1318 = vadd.f32 %v1218, %v1317
        %v1319 = vpop.f32.mrb[0].mxu0
        %1320 = vmatprep.mubr.f32.mxu0 0.0
        %v1321 = vand.u32 %v1007, 4294901760
        %v1322 = vsub.f32 %v1007, %v1321
        %1323 = vmatmul.mubr.f32.gmra.mrb[0].mxu0 %v1322
        %v1324 = vpop.f32.mrb[0].mxu0
        %v1325 = vadd.f32 %v1224, %v1324
        %v1326 = vpop.f32.mrb[0].mxu0
        %1327 = vdwg.mxu0
        %1328 = vmatprep.subr.mxu0 0.0
        %v1329 = vand.u32 %v964, 4294901760
        %1330 = vmatpush1.msra.mxu0 %v1329
        %1331 = vmatprep.subr.mxu0 0.0
        %v1332 = vand.u32 %v965, 4294901760
        %1333 = vmatpush1.msra.mxu0 %v1332
        %1334 = vmatprep.subr.mxu0 0.0
        %v1335 = vand.u32 %v966, 4294901760
        %1336 = vmatpush1.msra.mxu0 %v1335
        %1337 = vmatprep.subr.mxu0 0.0
        %v1338 = vand.u32 %v967, 4294901760
        %1339 = vmatpush1.msra.mxu0 %v1338
        %1340 = vmatprep.subr.mxu0 0.0
        %1341 = vmatpush1.msra.mxu0 0.0
        %1342 = vmatprep.subr.mxu0 0.0
        %1343 = vmatpush1.msra.mxu0 0.0
        %1344 = vmatprep.subr.mxu0 0.0
        %1345 = vmatpush1.msra.mxu0 0.0
        %1346 = vmatprep.subr.mxu0 0.0
        %1347 = vmatpush1.msra.mxu0 0.0
        %1348 = vmatprep.subr.mxu0 0.0
        %1349 = vmatpush1.msra.mxu0 0.0
        %1350 = vmatprep.subr.mxu0 0.0
        %1351 = vmatpush1.msra.mxu0 0.0
        %1352 = vmatprep.subr.mxu0 0.0
        %1353 = vmatpush1.msra.mxu0 0.0
        %1354 = vmatprep.subr.mxu0 0.0
        %1355 = vmatpush1.msra.mxu0 0.0
        %1356 = vmatprep.subr.mxu0 0.0
        %1357 = vmatpush1.msra.mxu0 0.0
        %1358 = vmatprep.subr.mxu0 0.0
        %1359 = vmatpush1.msra.mxu0 0.0
        %1360 = vmatprep.subr.mxu0 0.0
        %1361 = vmatpush1.msra.mxu0 0.0
        %1362 = vmatprep.subr.mxu0 0.0
        %1363 = vmatpush1.msra.mxu0 0.0
        %1364 = vmatprep.subr.mxu0 0.0
        %1365 = vmatpush1.msra.mxu0 0.0
        %1366 = vmatprep.subr.mxu0 0.0
        %1367 = vmatpush1.msra.mxu0 0.0
        %1368 = vmatprep.subr.mxu0 0.0
        %1369 = vmatpush1.msra.mxu0 0.0
        %1370 = vmatprep.subr.mxu0 0.0
        %1371 = vmatpush1.msra.mxu0 0.0
        %1372 = vmatprep.subr.mxu0 0.0
        %1373 = vmatpush1.msra.mxu0 0.0
        %1374 = vmatprep.subr.mxu0 0.0
        %1375 = vmatpush1.msra.mxu0 0.0
        %1376 = vmatprep.subr.mxu0 0.0
        %1377 = vmatpush1.msra.mxu0 0.0
        %1378 = vmatprep.subr.mxu0 0.0
        %1379 = vmatpush1.msra.mxu0 0.0
        %1380 = vmatprep.subr.mxu0 0.0
        %1381 = vmatpush1.msra.mxu0 0.0
        %1382 = vmatprep.subr.mxu0 0.0
        %1383 = vmatpush1.msra.mxu0 0.0
        %1384 = vmatprep.subr.mxu0 0.0
        %1385 = vmatpush1.msra.mxu0 0.0
        %1386 = vmatprep.subr.mxu0 0.0
        %1387 = vmatpush1.msra.mxu0 0.0
        %1388 = vmatprep.subr.mxu0 0.0
        %1389 = vmatpush1.msra.mxu0 0.0
        %1390 = vmatprep.subr.mxu0 0.0
        %1391 = vmatpush1.msra.mxu0 0.0
        %1392 = vmatprep.subr.mxu0 0.0
        %1393 = vmatpush1.msra.mxu0 0.0
        %1394 = vmatprep.subr.mxu0 0.0
        %1395 = vmatpush1.msra.mxu0 0.0
        %1396 = vmatprep.mubr.f32.mxu0 0.0
        %v1397 = vand.u32 %v998, 4294901760
        %v1398 = vsub.f32 %v998, %v1397
        %v1399 = vand.u32 %v1398, 4294901760
        %1400 = vmatmul.mubr.f32.gmra.mrb[0].mxu0 %v1399
        %v1401 = vpop.f32.mrb[0].mxu0
        %v1402 = vadd.f32 %v1304, %v1401
        %v1403 = vpop.f32.mrb[0].mxu0
        %1404 = vmatprep.mubr.f32.mxu0 0.0
        %v1405 = vand.u32 %v1001, 4294901760
        %v1406 = vsub.f32 %v1001, %v1405
        %v1407 = vand.u32 %v1406, 4294901760
        %1408 = vmatmul.mubr.f32.gmra.mrb[0].mxu0 %v1407
        %v1409 = vpop.f32.mrb[0].mxu0
        %v1410 = vadd.f32 %v1311, %v1409
        %v1411 = vpop.f32.mrb[0].mxu0
        %1412 = vmatprep.mubr.f32.mxu0 0.0
        %v1413 = vand.u32 %v1004, 4294901760
        %v1414 = vsub.f32 %v1004, %v1413
        %v1415 = vand.u32 %v1414, 4294901760
        %1416 = vmatmul.mubr.f32.gmra.mrb[0].mxu0 %v1415
        %v1417 = vpop.f32.mrb[0].mxu0
        %v1418 = vadd.f32 %v1318, %v1417
        %v1419 = vpop.f32.mrb[0].mxu0
        %1420 = vmatprep.mubr.f32.mxu0 0.0
        %v1421 = vand.u32 %v1007, 4294901760
        %v1422 = vsub.f32 %v1007, %v1421
        %v1423 = vand.u32 %v1422, 4294901760
        %1424 = vmatmul.mubr.f32.gmra.mrb[0].mxu0 %v1423
        %v1425 = vpop.f32.mrb[0].mxu0
        %v1426 = vadd.f32 %v1325, %v1425
        %v1427 = vpop.f32.mrb[0].mxu0
        %1428 = vdwg.mxu0
        %1429 = vmatprep.subr.mxu0 0.0
        %v1430 = vand.u32 %v964, 4294901760
        %v1431 = vsub.f32 %v964, %v1430
        %v1432 = vand.u32 %v1431, 4294901760
        %1433 = vmatpush1.msra.mxu0 %v1432
        %1434 = vmatprep.subr.mxu0 0.0
        %v1435 = vand.u32 %v965, 4294901760
        %v1436 = vsub.f32 %v965, %v1435
        %v1437 = vand.u32 %v1436, 4294901760
        %1438 = vmatpush1.msra.mxu0 %v1437
        %1439 = vmatprep.subr.mxu0 0.0
        %v1440 = vand.u32 %v966, 4294901760
        %v1441 = vsub.f32 %v966, %v1440
        %v1442 = vand.u32 %v1441, 4294901760
        %1443 = vmatpush1.msra.mxu0 %v1442
        %1444 = vmatprep.subr.mxu0 0.0
        %v1445 = vand.u32 %v967, 4294901760
        %v1446 = vsub.f32 %v967, %v1445
        %v1447 = vand.u32 %v1446, 4294901760
        %1448 = vmatpush1.msra.mxu0 %v1447
        %1449 = vmatprep.subr.mxu0 0.0
        %1450 = vmatpush1.msra.mxu0 0.0
        %1451 = vmatprep.subr.mxu0 0.0
        %1452 = vmatpush1.msra.mxu0 0.0
        %1453 = vmatprep.subr.mxu0 0.0
        %1454 = vmatpush1.msra.mxu0 0.0
        %1455 = vmatprep.subr.mxu0 0.0
        %1456 = vmatpush1.msra.mxu0 0.0
        %1457 = vmatprep.subr.mxu0 0.0
        %1458 = vmatpush1.msra.mxu0 0.0
        %1459 = vmatprep.subr.mxu0 0.0
        %1460 = vmatpush1.msra.mxu0 0.0
        %1461 = vmatprep.subr.mxu0 0.0
        %1462 = vmatpush1.msra.mxu0 0.0
        %1463 = vmatprep.subr.mxu0 0.0
        %1464 = vmatpush1.msra.mxu0 0.0
        %1465 = vmatprep.subr.mxu0 0.0
        %1466 = vmatpush1.msra.mxu0 0.0
        %1467 = vmatprep.subr.mxu0 0.0
        %1468 = vmatpush1.msra.mxu0 0.0
        %1469 = vmatprep.subr.mxu0 0.0
        %1470 = vmatpush1.msra.mxu0 0.0
        %1471 = vmatprep.subr.mxu0 0.0
        %1472 = vmatpush1.msra.mxu0 0.0
        %1473 = vmatprep.subr.mxu0 0.0
        %1474 = vmatpush1.msra.mxu0 0.0
        %1475 = vmatprep.subr.mxu0 0.0
        %1476 = vmatpush1.msra.mxu0 0.0
        %1477 = vmatprep.subr.mxu0 0.0
        %1478 = vmatpush1.msra.mxu0 0.0
        %1479 = vmatprep.subr.mxu0 0.0
        %1480 = vmatpush1.msra.mxu0 0.0
        %1481 = vmatprep.subr.mxu0 0.0
        %1482 = vmatpush1.msra.mxu0 0.0
        %1483 = vmatprep.subr.mxu0 0.0
        %1484 = vmatpush1.msra.mxu0 0.0
        %1485 = vmatprep.subr.mxu0 0.0
        %1486 = vmatpush1.msra.mxu0 0.0
        %1487 = vmatprep.subr.mxu0 0.0
        %1488 = vmatpush1.msra.mxu0 0.0
        %1489 = vmatprep.subr.mxu0 0.0
        %1490 = vmatpush1.msra.mxu0 0.0
        %1491 = vmatprep.subr.mxu0 0.0
        %1492 = vmatpush1.msra.mxu0 0.0
        %1493 = vmatprep.subr.mxu0 0.0
        %1494 = vmatpush1.msra.mxu0 0.0
        %1495 = vmatprep.subr.mxu0 0.0
        %1496 = vmatpush1.msra.mxu0 0.0
        %1497 = vmatprep.subr.mxu0 0.0
        %1498 = vmatpush1.msra.mxu0 0.0
        %1499 = vmatprep.subr.mxu0 0.0
        %1500 = vmatpush1.msra.mxu0 0.0
        %1501 = vmatprep.subr.mxu0 0.0
        %1502 = vmatpush1.msra.mxu0 0.0
        %1503 = vmatprep.subr.mxu0 0.0
        %1504 = vmatpush1.msra.mxu0 0.0
        %1505 = vmatprep.mubr.f32.mxu0 0.0
        %v1506 = vand.u32 %v998, 4294901760
        %1507 = vmatmul.mubr.f32.gmra.mrb[0].mxu0 %v1506
        %v1508 = vpop.f32.mrb[0].mxu0
        %v1509 = vadd.f32 %v1402, %v1508
        %v1510 = vpop.f32.mrb[0].mxu0
        %1511 = vmatprep.mubr.f32.mxu0 0.0
        %v1512 = vand.u32 %v1001, 4294901760
        %1513 = vmatmul.mubr.f32.gmra.mrb[0].mxu0 %v1512
        %v1514 = vpop.f32.mrb[0].mxu0
        %v1515 = vadd.f32 %v1410, %v1514
        %v1516 = vpop.f32.mrb[0].mxu0
        %1517 = vmatprep.mubr.f32.mxu0 0.0
        %v1518 = vand.u32 %v1004, 4294901760
        %1519 = vmatmul.mubr.f32.gmra.mrb[0].mxu0 %v1518
        %v1520 = vpop.f32.mrb[0].mxu0
        %v1521 = vadd.f32 %v1418, %v1520
        %v1522 = vpop.f32.mrb[0].mxu0
        %1523 = vmatprep.mubr.f32.mxu0 0.0
        %v1524 = vand.u32 %v1007, 4294901760
        %1525 = vmatmul.mubr.f32.gmra.mrb[0].mxu0 %v1524
        %v1526 = vpop.f32.mrb[0].mxu0
        %v1527 = vadd.f32 %v1426, %v1526
        %v1528 = vpop.f32.mrb[0].mxu0
        %1529 = vdwg.mxu0
        %1530 = vmatprep.subr.mxu0 0.0
        %v1531 = vand.u32 %v964, 4294901760
        %1532 = vmatpush1.msra.mxu0 %v1531
        %1533 = vmatprep.subr.mxu0 0.0
        %v1534 = vand.u32 %v965, 4294901760
        %1535 = vmatpush1.msra.mxu0 %v1534
        %1536 = vmatprep.subr.mxu0 0.0
        %v1537 = vand.u32 %v966, 4294901760
        %1538 = vmatpush1.msra.mxu0 %v1537
        %1539 = vmatprep.subr.mxu0 0.0
        %v1540 = vand.u32 %v967, 4294901760
        %1541 = vmatpush1.msra.mxu0 %v1540
        %1542 = vmatprep.subr.mxu0 0.0
        %1543 = vmatpush1.msra.mxu0 0.0
        %1544 = vmatprep.subr.mxu0 0.0
        %1545 = vmatpush1.msra.mxu0 0.0
        %1546 = vmatprep.subr.mxu0 0.0
        %1547 = vmatpush1.msra.mxu0 0.0
        %1548 = vmatprep.subr.mxu0 0.0
        %1549 = vmatpush1.msra.mxu0 0.0
        %1550 = vmatprep.subr.mxu0 0.0
        %1551 = vmatpush1.msra.mxu0 0.0
        %1552 = vmatprep.subr.mxu0 0.0
        %1553 = vmatpush1.msra.mxu0 0.0
        %1554 = vmatprep.subr.mxu0 0.0
        %1555 = vmatpush1.msra.mxu0 0.0
        %1556 = vmatprep.subr.mxu0 0.0
        %1557 = vmatpush1.msra.mxu0 0.0
        %1558 = vmatprep.subr.mxu0 0.0
        %1559 = vmatpush1.msra.mxu0 0.0
        %1560 = vmatprep.subr.mxu0 0.0
        %1561 = vmatpush1.msra.mxu0 0.0
        %1562 = vmatprep.subr.mxu0 0.0
        %1563 = vmatpush1.msra.mxu0 0.0
        %1564 = vmatprep.subr.mxu0 0.0
        %1565 = vmatpush1.msra.mxu0 0.0
        %1566 = vmatprep.subr.mxu0 0.0
        %1567 = vmatpush1.msra.mxu0 0.0
        %1568 = vmatprep.subr.mxu0 0.0
        %1569 = vmatpush1.msra.mxu0 0.0
        %1570 = vmatprep.subr.mxu0 0.0
        %1571 = vmatpush1.msra.mxu0 0.0
        %1572 = vmatprep.subr.mxu0 0.0
        %1573 = vmatpush1.msra.mxu0 0.0
        %1574 = vmatprep.subr.mxu0 0.0
        %1575 = vmatpush1.msra.mxu0 0.0
        %1576 = vmatprep.subr.mxu0 0.0
        %1577 = vmatpush1.msra.mxu0 0.0
        %1578 = vmatprep.subr.mxu0 0.0
        %1579 = vmatpush1.msra.mxu0 0.0
        %1580 = vmatprep.subr.mxu0 0.0
        %1581 = vmatpush1.msra.mxu0 0.0
        %1582 = vmatprep.subr.mxu0 0.0
        %1583 = vmatpush1.msra.mxu0 0.0
        %1584 = vmatprep.subr.mxu0 0.0
        %1585 = vmatpush1.msra.mxu0 0.0
        %1586 = vmatprep.subr.mxu0 0.0
        %1587 = vmatpush1.msra.mxu0 0.0
        %1588 = vmatprep.subr.mxu0 0.0
        %1589 = vmatpush1.msra.mxu0 0.0
        %1590 = vmatprep.subr.mxu0 0.0
        %1591 = vmatpush1.msra.mxu0 0.0
        %1592 = vmatprep.subr.mxu0 0.0
        %1593 = vmatpush1.msra.mxu0 0.0
        %1594 = vmatprep.subr.mxu0 0.0
        %1595 = vmatpush1.msra.mxu0 0.0
        %1596 = vmatprep.subr.mxu0 0.0
        %1597 = vmatpush1.msra.mxu0 0.0
        %1598 = vmatprep.mubr.f32.mxu0 0.0
        %v1599 = vand.u32 %v998, 4294901760
        %1600 = vmatmul.mubr.f32.gmra.mrb[0].mxu0 %v1599
        %v1601 = vpop.f32.mrb[0].mxu0
        %v1602 = vadd.f32 %v1509, %v1601
        %v1603 = vpop.f32.mrb[0].mxu0
        %1604 = vmatprep.mubr.f32.mxu0 0.0
        %v1605 = vand.u32 %v1001, 4294901760
        %1606 = vmatmul.mubr.f32.gmra.mrb[0].mxu0 %v1605
        %v1607 = vpop.f32.mrb[0].mxu0
        %v1608 = vadd.f32 %v1515, %v1607
        %v1609 = vpop.f32.mrb[0].mxu0
        %1610 = vmatprep.mubr.f32.mxu0 0.0
        %v1611 = vand.u32 %v1004, 4294901760
        %1612 = vmatmul.mubr.f32.gmra.mrb[0].mxu0 %v1611
        %v1613 = vpop.f32.mrb[0].mxu0
        %v1614 = vadd.f32 %v1521, %v1613
        %v1615 = vpop.f32.mrb[0].mxu0
        %1616 = vmatprep.mubr.f32.mxu0 0.0
        %v1617 = vand.u32 %v1007, 4294901760
        %1618 = vmatmul.mubr.f32.gmra.mrb[0].mxu0 %v1617
        %v1619 = vpop.f32.mrb[0].mxu0
        %v1620 = vadd.f32 %v1527, %v1619
        %v1621 = vpop.f32.mrb[0].mxu0
        %1622 = vdwg.mxu0
        %v1623 = vmax.f32 %v1602, 0.0
        %v1624 = vmax.f32 %v1608, 0.0
        %v1625 = vmax.f32 %v1614, 0.0
        %v1626 = vmax.f32 %v1620, 0.0
        %v1627 = vld [vmem:[%s5] sm:$0xff]
        %v1628 = vld [vmem:[%s5 + $0x8] sm:$0xff]
        %v1629 = vld [vmem:[%s6] sm:$0xff]
        %v1630 = vld [vmem:[%s6 + $0x8] sm:$0xff]
        %1632 = vset.pattern.permute.xlu0 0
        %1633 = vperm.xlu0 %1632, %v1629
        %v1634 = vpop.permute.xlu0 %1633
        %1637 = vset.pattern.permute.xlu0 0
        %1638 = vperm.xlu0 %1637, %v1630
        %v1639 = vpop.permute.xlu0 %1638
        %v1642 = vsel %vm996, %v1627, 0
        %v1645 = vsel %vm996, %v1628, 0
        %1647 = vmatprep.subr.mxu0 0.0
        %v1648 = vand.u32 %v1623, 4294901760
        %1649 = vmatpush1.msra.mxu0 %v1648
        %1650 = vmatprep.subr.mxu0 0.0
        %v1651 = vand.u32 %v1624, 4294901760
        %1652 = vmatpush1.msra.mxu0 %v1651
        %1653 = vmatprep.subr.mxu0 0.0
        %v1654 = vand.u32 %v1625, 4294901760
        %1655 = vmatpush1.msra.mxu0 %v1654
        %1656 = vmatprep.subr.mxu0 0.0
        %v1657 = vand.u32 %v1626, 4294901760
        %1658 = vmatpush1.msra.mxu0 %v1657
        %1659 = vmatprep.subr.mxu0 0.0
        %1660 = vmatpush1.msra.mxu0 0.0
        %1661 = vmatprep.subr.mxu0 0.0
        %1662 = vmatpush1.msra.mxu0 0.0
        %1663 = vmatprep.subr.mxu0 0.0
        %1664 = vmatpush1.msra.mxu0 0.0
        %1665 = vmatprep.subr.mxu0 0.0
        %1666 = vmatpush1.msra.mxu0 0.0
        %1667 = vmatprep.subr.mxu0 0.0
        %1668 = vmatpush1.msra.mxu0 0.0
        %1669 = vmatprep.subr.mxu0 0.0
        %1670 = vmatpush1.msra.mxu0 0.0
        %1671 = vmatprep.subr.mxu0 0.0
        %1672 = vmatpush1.msra.mxu0 0.0
        %1673 = vmatprep.subr.mxu0 0.0
        %1674 = vmatpush1.msra.mxu0 0.0
        %1675 = vmatprep.subr.mxu0 0.0
        %1676 = vmatpush1.msra.mxu0 0.0
        %1677 = vmatprep.subr.mxu0 0.0
        %1678 = vmatpush1.msra.mxu0 0.0
        %1679 = vmatprep.subr.mxu0 0.0
        %1680 = vmatpush1.msra.mxu0 0.0
        %1681 = vmatprep.subr.mxu0 0.0
        %1682 = vmatpush1.msra.mxu0 0.0
        %1683 = vmatprep.subr.mxu0 0.0
        %1684 = vmatpush1.msra.mxu0 0.0
        %1685 = vmatprep.subr.mxu0 0.0
        %1686 = vmatpush1.msra.mxu0 0.0
        %1687 = vmatprep.subr.mxu0 0.0
        %1688 = vmatpush1.msra.mxu0 0.0
        %1689 = vmatprep.subr.mxu0 0.0
        %1690 = vmatpush1.msra.mxu0 0.0
        %1691 = vmatprep.subr.mxu0 0.0
        %1692 = vmatpush1.msra.mxu0 0.0
        %1693 = vmatprep.subr.mxu0 0.0
        %1694 = vmatpush1.msra.mxu0 0.0
        %1695 = vmatprep.subr.mxu0 0.0
        %1696 = vmatpush1.msra.mxu0 0.0
        %1697 = vmatprep.subr.mxu0 0.0
        %1698 = vmatpush1.msra.mxu0 0.0
        %1699 = vmatprep.subr.mxu0 0.0
        %1700 = vmatpush1.msra.mxu0 0.0
        %1701 = vmatprep.subr.mxu0 0.0
        %1702 = vmatpush1.msra.mxu0 0.0
        %1703 = vmatprep.subr.mxu0 0.0
        %1704 = vmatpush1.msra.mxu0 0.0
        %1705 = vmatprep.subr.mxu0 0.0
        %1706 = vmatpush1.msra.mxu0 0.0
        %1707 = vmatprep.subr.mxu0 0.0
        %1708 = vmatpush1.msra.mxu0 0.0
        %1709 = vmatprep.subr.mxu0 0.0
        %1710 = vmatpush1.msra.mxu0 0.0
        %1711 = vmatprep.subr.mxu0 0.0
        %1712 = vmatpush1.msra.mxu0 0.0
        %1713 = vmatprep.subr.mxu0 0.0
        %1714 = vmatpush1.msra.mxu0 0.0
        %1715 = vmatprep.mubr.f32.mxu0 0.0
        %v1716 = vand.u32 %v1642, 4294901760
        %v1717 = vsub.f32 %v1642, %v1716
        %v1718 = vand.u32 %v1717, 4294901760
        %v1719 = vsub.f32 %v1717, %v1718
        %v1720 = vand.u32 %v1719, 4294901760
        %1721 = vmatmul.mubr.f32.gmra.mrb[0].mxu0 %v1720
        %v1722 = vpop.f32.mrb[0].mxu0
        %v1723 = vadd.f32 %v1634, %v1722
        %v1724 = vpop.f32.mrb[0].mxu0
        %1725 = vmatprep.mubr.f32.mxu0 0.0
        %v1726 = vand.u32 %v1645, 4294901760
        %v1727 = vsub.f32 %v1645, %v1726
        %v1728 = vand.u32 %v1727, 4294901760
        %v1729 = vsub.f32 %v1727, %v1728
        %v1730 = vand.u32 %v1729, 4294901760
        %1731 = vmatmul.mubr.f32.gmra.mrb[0].mxu0 %v1730
        %v1732 = vpop.f32.mrb[0].mxu0
        %v1733 = vadd.f32 %v1639, %v1732
        %v1734 = vpop.f32.mrb[0].mxu0
        %1735 = vdwg.mxu0
        %1736 = vmatprep.subr.mxu0 0.0
        %v1737 = vand.u32 %v1623, 4294901760
        %v1738 = vsub.f32 %v1623, %v1737
        %v1739 = vand.u32 %v1738, 4294901760
        %v1740 = vsub.f32 %v1738, %v1739
        %v1741 = vand.u32 %v1740, 4294901760
        %1742 = vmatpush1.msra.mxu0 %v1741
        %1743 = vmatprep.subr.mxu0 0.0
        %v1744 = vand.u32 %v1624, 4294901760
        %v1745 = vsub.f32 %v1624, %v1744
        %v1746 = vand.u32 %v1745, 4294901760
        %v1747 = vsub.f32 %v1745, %v1746
        %v1748 = vand.u32 %v1747, 4294901760
        %1749 = vmatpush1.msra.mxu0 %v1748
        %1750 = vmatprep.subr.mxu0 0.0
        %v1751 = vand.u32 %v1625, 4294901760
        %v1752 = vsub.f32 %v1625, %v1751
        %v1753 = vand.u32 %v1752, 4294901760
        %v1754 = vsub.f32 %v1752, %v1753
        %v1755 = vand.u32 %v1754, 4294901760
        %1756 = vmatpush1.msra.mxu0 %v1755
        %1757 = vmatprep.subr.mxu0 0.0
        %v1758 = vand.u32 %v1626, 4294901760
        %v1759 = vsub.f32 %v1626, %v1758
        %v1760 = vand.u32 %v1759, 4294901760
        %v1761 = vsub.f32 %v1759, %v1760
        %v1762 = vand.u32 %v1761, 4294901760
        %1763 = vmatpush1.msra.mxu0 %v1762
        %1764 = vmatprep.subr.mxu0 0.0
        %1765 = vmatpush1.msra.mxu0 0.0
        %1766 = vmatprep.subr.mxu0 0.0
        %1767 = vmatpush1.msra.mxu0 0.0
        %1768 = vmatprep.subr.mxu0 0.0
        %1769 = vmatpush1.msra.mxu0 0.0
        %1770 = vmatprep.subr.mxu0 0.0
        %1771 = vmatpush1.msra.mxu0 0.0
        %1772 = vmatprep.subr.mxu0 0.0
        %1773 = vmatpush1.msra.mxu0 0.0
        %1774 = vmatprep.subr.mxu0 0.0
        %1775 = vmatpush1.msra.mxu0 0.0
        %1776 = vmatprep.subr.mxu0 0.0
        %1777 = vmatpush1.msra.mxu0 0.0
        %1778 = vmatprep.subr.mxu0 0.0
        %1779 = vmatpush1.msra.mxu0 0.0
        %1780 = vmatprep.subr.mxu0 0.0
        %1781 = vmatpush1.msra.mxu0 0.0
        %1782 = vmatprep.subr.mxu0 0.0
        %1783 = vmatpush1.msra.mxu0 0.0
        %1784 = vmatprep.subr.mxu0 0.0
        %1785 = vmatpush1.msra.mxu0 0.0
        %1786 = vmatprep.subr.mxu0 0.0
        %1787 = vmatpush1.msra.mxu0 0.0
        %1788 = vmatprep.subr.mxu0 0.0
        %1789 = vmatpush1.msra.mxu0 0.0
        %1790 = vmatprep.subr.mxu0 0.0
        %1791 = vmatpush1.msra.mxu0 0.0
        %1792 = vmatprep.subr.mxu0 0.0
        %1793 = vmatpush1.msra.mxu0 0.0
        %1794 = vmatprep.subr.mxu0 0.0
        %1795 = vmatpush1.msra.mxu0 0.0
        %1796 = vmatprep.subr.mxu0 0.0
        %1797 = vmatpush1.msra.mxu0 0.0
        %1798 = vmatprep.subr.mxu0 0.0
        %1799 = vmatpush1.msra.mxu0 0.0
        %1800 = vmatprep.subr.mxu0 0.0
        %1801 = vmatpush1.msra.mxu0 0.0
        %1802 = vmatprep.subr.mxu0 0.0
        %1803 = vmatpush1.msra.mxu0 0.0
        %1804 = vmatprep.subr.mxu0 0.0
        %1805 = vmatpush1.msra.mxu0 0.0
        %1806 = vmatprep.subr.mxu0 0.0
        %1807 = vmatpush1.msra.mxu0 0.0
        %1808 = vmatprep.subr.mxu0 0.0
        %1809 = vmatpush1.msra.mxu0 0.0
        %1810 = vmatprep.subr.mxu0 0.0
        %1811 = vmatpush1.msra.mxu0 0.0
        %1812 = vmatprep.subr.mxu0 0.0
        %1813 = vmatpush1.msra.mxu0 0.0
        %1814 = vmatprep.subr.mxu0 0.0
        %1815 = vmatpush1.msra.mxu0 0.0
        %1816 = vmatprep.subr.mxu0 0.0
        %1817 = vmatpush1.msra.mxu0 0.0
        %1818 = vmatprep.subr.mxu0 0.0
        %1819 = vmatpush1.msra.mxu0 0.0
        %1820 = vmatprep.mubr.f32.mxu0 0.0
        %v1821 = vand.u32 %v1642, 4294901760
        %1822 = vmatmul.mubr.f32.gmra.mrb[0].mxu0 %v1821
        %v1823 = vpop.f32.mrb[0].mxu0
        %v1824 = vadd.f32 %v1723, %v1823
        %v1825 = vpop.f32.mrb[0].mxu0
        %1826 = vmatprep.mubr.f32.mxu0 0.0
        %v1827 = vand.u32 %v1645, 4294901760
        %1828 = vmatmul.mubr.f32.gmra.mrb[0].mxu0 %v1827
        %v1829 = vpop.f32.mrb[0].mxu0
        %v1830 = vadd.f32 %v1733, %v1829
        %v1831 = vpop.f32.mrb[0].mxu0
        %1832 = vdwg.mxu0
        %1833 = vmatprep.subr.mxu0 0.0
        %v1834 = vand.u32 %v1623, 4294901760
        %v1835 = vsub.f32 %v1623, %v1834
        %1836 = vmatpush1.msra.mxu0 %v1835
        %1837 = vmatprep.subr.mxu0 0.0
        %v1838 = vand.u32 %v1624, 4294901760
        %v1839 = vsub.f32 %v1624, %v1838
        %1840 = vmatpush1.msra.mxu0 %v1839
        %1841 = vmatprep.subr.mxu0 0.0
        %v1842 = vand.u32 %v1625, 4294901760
        %v1843 = vsub.f32 %v1625, %v1842
        %1844 = vmatpush1.msra.mxu0 %v1843
        %1845 = vmatprep.subr.mxu0 0.0
        %v1846 = vand.u32 %v1626, 4294901760
        %v1847 = vsub.f32 %v1626, %v1846
        %1848 = vmatpush1.msra.mxu0 %v1847
        %1849 = vmatprep.subr.mxu0 0.0
        %1850 = vmatpush1.msra.mxu0 0.0
        %1851 = vmatprep.subr.mxu0 0.0
        %1852 = vmatpush1.msra.mxu0 0.0
        %1853 = vmatprep.subr.mxu0 0.0
        %1854 = vmatpush1.msra.mxu0 0.0
        %1855 = vmatprep.subr.mxu0 0.0
        %1856 = vmatpush1.msra.mxu0 0.0
        %1857 = vmatprep.subr.mxu0 0.0
        %1858 = vmatpush1.msra.mxu0 0.0
        %1859 = vmatprep.subr.mxu0 0.0
        %1860 = vmatpush1.msra.mxu0 0.0
        %1861 = vmatprep.subr.mxu0 0.0
        %1862 = vmatpush1.msra.mxu0 0.0
        %1863 = vmatprep.subr.mxu0 0.0
        %1864 = vmatpush1.msra.mxu0 0.0
        %1865 = vmatprep.subr.mxu0 0.0
        %1866 = vmatpush1.msra.mxu0 0.0
        %1867 = vmatprep.subr.mxu0 0.0
        %1868 = vmatpush1.msra.mxu0 0.0
        %1869 = vmatprep.subr.mxu0 0.0
        %1870 = vmatpush1.msra.mxu0 0.0
        %1871 = vmatprep.subr.mxu0 0.0
        %1872 = vmatpush1.msra.mxu0 0.0
        %1873 = vmatprep.subr.mxu0 0.0
        %1874 = vmatpush1.msra.mxu0 0.0
        %1875 = vmatprep.subr.mxu0 0.0
        %1876 = vmatpush1.msra.mxu0 0.0
        %1877 = vmatprep.subr.mxu0 0.0
        %1878 = vmatpush1.msra.mxu0 0.0
        %1879 = vmatprep.subr.mxu0 0.0
        %1880 = vmatpush1.msra.mxu0 0.0
        %1881 = vmatprep.subr.mxu0 0.0
        %1882 = vmatpush1.msra.mxu0 0.0
        %1883 = vmatprep.subr.mxu0 0.0
        %1884 = vmatpush1.msra.mxu0 0.0
        %1885 = vmatprep.subr.mxu0 0.0
        %1886 = vmatpush1.msra.mxu0 0.0
        %1887 = vmatprep.subr.mxu0 0.0
        %1888 = vmatpush1.msra.mxu0 0.0
        %1889 = vmatprep.subr.mxu0 0.0
        %1890 = vmatpush1.msra.mxu0 0.0
        %1891 = vmatprep.subr.mxu0 0.0
        %1892 = vmatpush1.msra.mxu0 0.0
        %1893 = vmatprep.subr.mxu0 0.0
        %1894 = vmatpush1.msra.mxu0 0.0
        %1895 = vmatprep.subr.mxu0 0.0
        %1896 = vmatpush1.msra.mxu0 0.0
        %1897 = vmatprep.subr.mxu0 0.0
        %1898 = vmatpush1.msra.mxu0 0.0
        %1899 = vmatprep.subr.mxu0 0.0
        %1900 = vmatpush1.msra.mxu0 0.0
        %1901 = vmatprep.subr.mxu0 0.0
        %1902 = vmatpush1.msra.mxu0 0.0
        %1903 = vmatprep.subr.mxu0 0.0
        %1904 = vmatpush1.msra.mxu0 0.0
        %1905 = vmatprep.mubr.f32.mxu0 0.0
        %v1906 = vand.u32 %v1642, 4294901760
        %v1907 = vsub.f32 %v1642, %v1906
        %1908 = vmatmul.mubr.f32.gmra.mrb[0].mxu0 %v1907
        %v1909 = vpop.f32.mrb[0].mxu0
        %v1910 = vadd.f32 %v1824, %v1909
        %v1911 = vpop.f32.mrb[0].mxu0
        %1912 = vmatprep.mubr.f32.mxu0 0.0
        %v1913 = vand.u32 %v1645, 4294901760
        %v1914 = vsub.f32 %v1645, %v1913
        %1915 = vmatmul.mubr.f32.gmra.mrb[0].mxu0 %v1914
        %v1916 = vpop.f32.mrb[0].mxu0
        %v1917 = vadd.f32 %v1830, %v1916
        %v1918 = vpop.f32.mrb[0].mxu0
        %1919 = vdwg.mxu0
        %1920 = vmatprep.subr.mxu0 0.0
        %v1921 = vand.u32 %v1623, 4294901760
        %1922 = vmatpush1.msra.mxu0 %v1921
        %1923 = vmatprep.subr.mxu0 0.0
        %v1924 = vand.u32 %v1624, 4294901760
        %1925 = vmatpush1.msra.mxu0 %v1924
        %1926 = vmatprep.subr.mxu0 0.0
        %v1927 = vand.u32 %v1625, 4294901760
        %1928 = vmatpush1.msra.mxu0 %v1927
        %1929 = vmatprep.subr.mxu0 0.0
        %v1930 = vand.u32 %v1626, 4294901760
        %1931 = vmatpush1.msra.mxu0 %v1930
        %1932 = vmatprep.subr.mxu0 0.0
        %1933 = vmatpush1.msra.mxu0 0.0
        %1934 = vmatprep.subr.mxu0 0.0
        %1935 = vmatpush1.msra.mxu0 0.0
        %1936 = vmatprep.subr.mxu0 0.0
        %1937 = vmatpush1.msra.mxu0 0.0
        %1938 = vmatprep.subr.mxu0 0.0
        %1939 = vmatpush1.msra.mxu0 0.0
        %1940 = vmatprep.subr.mxu0 0.0
        %1941 = vmatpush1.msra.mxu0 0.0
        %1942 = vmatprep.subr.mxu0 0.0
        %1943 = vmatpush1.msra.mxu0 0.0
        %1944 = vmatprep.subr.mxu0 0.0
        %1945 = vmatpush1.msra.mxu0 0.0
        %1946 = vmatprep.subr.mxu0 0.0
        %1947 = vmatpush1.msra.mxu0 0.0
        %1948 = vmatprep.subr.mxu0 0.0
        %1949 = vmatpush1.msra.mxu0 0.0
        %1950 = vmatprep.subr.mxu0 0.0
        %1951 = vmatpush1.msra.mxu0 0.0
        %1952 = vmatprep.subr.mxu0 0.0
        %1953 = vmatpush1.msra.mxu0 0.0
        %1954 = vmatprep.subr.mxu0 0.0
        %1955 = vmatpush1.msra.mxu0 0.0
        %1956 = vmatprep.subr.mxu0 0.0
        %1957 = vmatpush1.msra.mxu0 0.0
        %1958 = vmatprep.subr.mxu0 0.0
        %1959 = vmatpush1.msra.mxu0 0.0
        %1960 = vmatprep.subr.mxu0 0.0
        %1961 = vmatpush1.msra.mxu0 0.0
        %1962 = vmatprep.subr.mxu0 0.0
        %1963 = vmatpush1.msra.mxu0 0.0
        %1964 = vmatprep.subr.mxu0 0.0
        %1965 = vmatpush1.msra.mxu0 0.0
        %1966 = vmatprep.subr.mxu0 0.0
        %1967 = vmatpush1.msra.mxu0 0.0
        %1968 = vmatprep.subr.mxu0 0.0
        %1969 = vmatpush1.msra.mxu0 0.0
        %1970 = vmatprep.subr.mxu0 0.0
        %1971 = vmatpush1.msra.mxu0 0.0
        %1972 = vmatprep.subr.mxu0 0.0
        %1973 = vmatpush1.msra.mxu0 0.0
        %1974 = vmatprep.subr.mxu0 0.0
        %1975 = vmatpush1.msra.mxu0 0.0
        %1976 = vmatprep.subr.mxu0 0.0
        %1977 = vmatpush1.msra.mxu0 0.0
        %1978 = vmatprep.subr.mxu0 0.0
        %1979 = vmatpush1.msra.mxu0 0.0
        %1980 = vmatprep.subr.mxu0 0.0
        %1981 = vmatpush1.msra.mxu0 0.0
        %1982 = vmatprep.subr.mxu0 0.0
        %1983 = vmatpush1.msra.mxu0 0.0
        %1984 = vmatprep.subr.mxu0 0.0
        %1985 = vmatpush1.msra.mxu0 0.0
        %1986 = vmatprep.subr.mxu0 0.0
        %1987 = vmatpush1.msra.mxu0 0.0
        %1988 = vmatprep.mubr.f32.mxu0 0.0
        %v1989 = vand.u32 %v1642, 4294901760
        %v1990 = vsub.f32 %v1642, %v1989
        %v1991 = vand.u32 %v1990, 4294901760
        %1992 = vmatmul.mubr.f32.gmra.mrb[0].mxu0 %v1991
        %v1993 = vpop.f32.mrb[0].mxu0
        %v1994 = vadd.f32 %v1910, %v1993
        %v1995 = vpop.f32.mrb[0].mxu0
        %1996 = vmatprep.mubr.f32.mxu0 0.0
        %v1997 = vand.u32 %v1645, 4294901760
        %v1998 = vsub.f32 %v1645, %v1997
        %v1999 = vand.u32 %v1998, 4294901760
        %2000 = vmatmul.mubr.f32.gmra.mrb[0].mxu0 %v1999
        %v2001 = vpop.f32.mrb[0].mxu0
        %v2002 = vadd.f32 %v1917, %v2001
        %v2003 = vpop.f32.mrb[0].mxu0
        %2004 = vdwg.mxu0
        %2005 = vmatprep.subr.mxu0 0.0
        %v2006 = vand.u32 %v1623, 4294901760
        %v2007 = vsub.f32 %v1623, %v2006
        %v2008 = vand.u32 %v2007, 4294901760
        %2009 = vmatpush1.msra.mxu0 %v2008
        %2010 = vmatprep.subr.mxu0 0.0
        %v2011 = vand.u32 %v1624, 4294901760
        %v2012 = vsub.f32 %v1624, %v2011
        %v2013 = vand.u32 %v2012, 4294901760
        %2014 = vmatpush1.msra.mxu0 %v2013
        %2015 = vmatprep.subr.mxu0 0.0
        %v2016 = vand.u32 %v1625, 4294901760
        %v2017 = vsub.f32 %v1625, %v2016
        %v2018 = vand.u32 %v2017, 4294901760
        %2019 = vmatpush1.msra.mxu0 %v2018
        %2020 = vmatprep.subr.mxu0 0.0
        %v2021 = vand.u32 %v1626, 4294901760
        %v2022 = vsub.f32 %v1626, %v2021
        %v2023 = vand.u32 %v2022, 4294901760
        %2024 = vmatpush1.msra.mxu0 %v2023
        %2025 = vmatprep.subr.mxu0 0.0
        %2026 = vmatpush1.msra.mxu0 0.0
        %2027 = vmatprep.subr.mxu0 0.0
        %2028 = vmatpush1.msra.mxu0 0.0
        %2029 = vmatprep.subr.mxu0 0.0
        %2030 = vmatpush1.msra.mxu0 0.0
        %2031 = vmatprep.subr.mxu0 0.0
        %2032 = vmatpush1.msra.mxu0 0.0
        %2033 = vmatprep.subr.mxu0 0.0
        %2034 = vmatpush1.msra.mxu0 0.0
        %2035 = vmatprep.subr.mxu0 0.0
        %2036 = vmatpush1.msra.mxu0 0.0
        %2037 = vmatprep.subr.mxu0 0.0
        %2038 = vmatpush1.msra.mxu0 0.0
        %2039 = vmatprep.subr.mxu0 0.0
        %2040 = vmatpush1.msra.mxu0 0.0
        %2041 = vmatprep.subr.mxu0 0.0
        %2042 = vmatpush1.msra.mxu0 0.0
        %2043 = vmatprep.subr.mxu0 0.0
        %2044 = vmatpush1.msra.mxu0 0.0
        %2045 = vmatprep.subr.mxu0 0.0
        %2046 = vmatpush1.msra.mxu0 0.0
        %2047 = vmatprep.subr.mxu0 0.0
        %2048 = vmatpush1.msra.mxu0 0.0
        %2049 = vmatprep.subr.mxu0 0.0
        %2050 = vmatpush1.msra.mxu0 0.0
        %2051 = vmatprep.subr.mxu0 0.0
        %2052 = vmatpush1.msra.mxu0 0.0
        %2053 = vmatprep.subr.mxu0 0.0
        %2054 = vmatpush1.msra.mxu0 0.0
        %2055 = vmatprep.subr.mxu0 0.0
        %2056 = vmatpush1.msra.mxu0 0.0
        %2057 = vmatprep.subr.mxu0 0.0
        %2058 = vmatpush1.msra.mxu0 0.0
        %2059 = vmatprep.subr.mxu0 0.0
        %2060 = vmatpush1.msra.mxu0 0.0
        %2061 = vmatprep.subr.mxu0 0.0
        %2062 = vmatpush1.msra.mxu0 0.0
        %2063 = vmatprep.subr.mxu0 0.0
        %2064 = vmatpush1.msra.mxu0 0.0
        %2065 = vmatprep.subr.mxu0 0.0
        %2066 = vmatpush1.msra.mxu0 0.0
        %2067 = vmatprep.subr.mxu0 0.0
        %2068 = vmatpush1.msra.mxu0 0.0
        %2069 = vmatprep.subr.mxu0 0.0
        %2070 = vmatpush1.msra.mxu0 0.0
        %2071 = vmatprep.subr.mxu0 0.0
        %2072 = vmatpush1.msra.mxu0 0.0
        %2073 = vmatprep.subr.mxu0 0.0
        %2074 = vmatpush1.msra.mxu0 0.0
        %2075 = vmatprep.subr.mxu0 0.0
        %2076 = vmatpush1.msra.mxu0 0.0
        %2077 = vmatprep.subr.mxu0 0.0
        %2078 = vmatpush1.msra.mxu0 0.0
        %2079 = vmatprep.subr.mxu0 0.0
        %2080 = vmatpush1.msra.mxu0 0.0
        %2081 = vmatprep.mubr.f32.mxu0 0.0
        %v2082 = vand.u32 %v1642, 4294901760
        %2083 = vmatmul.mubr.f32.gmra.mrb[0].mxu0 %v2082
        %v2084 = vpop.f32.mrb[0].mxu0
        %v2085 = vadd.f32 %v1994, %v2084
        %v2086 = vpop.f32.mrb[0].mxu0
        %2087 = vmatprep.mubr.f32.mxu0 0.0
        %v2088 = vand.u32 %v1645, 4294901760
        %2089 = vmatmul.mubr.f32.gmra.mrb[0].mxu0 %v2088
        %v2090 = vpop.f32.mrb[0].mxu0
        %v2091 = vadd.f32 %v2002, %v2090
        %v2092 = vpop.f32.mrb[0].mxu0
        %2093 = vdwg.mxu0
        %2094 = vmatprep.subr.mxu0 0.0
        %v2095 = vand.u32 %v1623, 4294901760
        %2096 = vmatpush1.msra.mxu0 %v2095
        %2097 = vmatprep.subr.mxu0 0.0
        %v2098 = vand.u32 %v1624, 4294901760
        %2099 = vmatpush1.msra.mxu0 %v2098
        %2100 = vmatprep.subr.mxu0 0.0
        %v2101 = vand.u32 %v1625, 4294901760
        %2102 = vmatpush1.msra.mxu0 %v2101
        %2103 = vmatprep.subr.mxu0 0.0
        %v2104 = vand.u32 %v1626, 4294901760
        %2105 = vmatpush1.msra.mxu0 %v2104
        %2106 = vmatprep.subr.mxu0 0.0
        %2107 = vmatpush1.msra.mxu0 0.0
        %2108 = vmatprep.subr.mxu0 0.0
        %2109 = vmatpush1.msra.mxu0 0.0
        %2110 = vmatprep.subr.mxu0 0.0
        %2111 = vmatpush1.msra.mxu0 0.0
        %2112 = vmatprep.subr.mxu0 0.0
        %2113 = vmatpush1.msra.mxu0 0.0
        %2114 = vmatprep.subr.mxu0 0.0
        %2115 = vmatpush1.msra.mxu0 0.0
        %2116 = vmatprep.subr.mxu0 0.0
        %2117 = vmatpush1.msra.mxu0 0.0
        %2118 = vmatprep.subr.mxu0 0.0
        %2119 = vmatpush1.msra.mxu0 0.0
        %2120 = vmatprep.subr.mxu0 0.0
        %2121 = vmatpush1.msra.mxu0 0.0
        %2122 = vmatprep.subr.mxu0 0.0
        %2123 = vmatpush1.msra.mxu0 0.0
        %2124 = vmatprep.subr.mxu0 0.0
        %2125 = vmatpush1.msra.mxu0 0.0
        %2126 = vmatprep.subr.mxu0 0.0
        %2127 = vmatpush1.msra.mxu0 0.0
        %2128 = vmatprep.subr.mxu0 0.0
        %2129 = vmatpush1.msra.mxu0 0.0
        %2130 = vmatprep.subr.mxu0 0.0
        %2131 = vmatpush1.msra.mxu0 0.0
        %2132 = vmatprep.subr.mxu0 0.0
        %2133 = vmatpush1.msra.mxu0 0.0
        %2134 = vmatprep.subr.mxu0 0.0
        %2135 = vmatpush1.msra.mxu0 0.0
        %2136 = vmatprep.subr.mxu0 0.0
        %2137 = vmatpush1.msra.mxu0 0.0
        %2138 = vmatprep.subr.mxu0 0.0
        %2139 = vmatpush1.msra.mxu0 0.0
        %2140 = vmatprep.subr.mxu0 0.0
        %2141 = vmatpush1.msra.mxu0 0.0
        %2142 = vmatprep.subr.mxu0 0.0
        %2143 = vmatpush1.msra.mxu0 0.0
        %2144 = vmatprep.subr.mxu0 0.0
        %2145 = vmatpush1.msra.mxu0 0.0
        %2146 = vmatprep.subr.mxu0 0.0
        %2147 = vmatpush1.msra.mxu0 0.0
        %2148 = vmatprep.subr.mxu0 0.0
        %2149 = vmatpush1.msra.mxu0 0.0
        %2150 = vmatprep.subr.mxu0 0.0
        %2151 = vmatpush1.msra.mxu0 0.0
        %2152 = vmatprep.subr.mxu0 0.0
        %2153 = vmatpush1.msra.mxu0 0.0
        %2154 = vmatprep.subr.mxu0 0.0
        %2155 = vmatpush1.msra.mxu0 0.0
        %2156 = vmatprep.subr.mxu0 0.0
        %2157 = vmatpush1.msra.mxu0 0.0
        %2158 = vmatprep.subr.mxu0 0.0
        %2159 = vmatpush1.msra.mxu0 0.0
        %2160 = vmatprep.subr.mxu0 0.0
        %2161 = vmatpush1.msra.mxu0 0.0
        %2162 = vmatprep.mubr.f32.mxu0 0.0
        %v2163 = vand.u32 %v1642, 4294901760
        %2164 = vmatmul.mubr.f32.gmra.mrb[0].mxu0 %v2163
        %v2165 = vpop.f32.mrb[0].mxu0
        %v2166 = vadd.f32 %v2085, %v2165
        %v2167 = vpop.f32.mrb[0].mxu0
        %2168 = vmatprep.mubr.f32.mxu0 0.0
        %v2169 = vand.u32 %v1645, 4294901760
        %2170 = vmatmul.mubr.f32.gmra.mrb[0].mxu0 %v2169
        %v2171 = vpop.f32.mrb[0].mxu0
        %v2172 = vadd.f32 %v2091, %v2171
        %v2173 = vpop.f32.mrb[0].mxu0
        %2174 = vdwg.mxu0
        %2175 = vst [vmem:[%s318] sm:$0xff] %v2166
        %2176 = vst [vmem:[%s318 + $0x8] sm:$0xff] %v2172
        %s2177 = sand.u32 %s181, 1
        %s2178 = scalar_lea.sflag [#allocation4], %s2177
        %s2179 = sand.u32 %s181, 1
        %s2180 = smul.addr %s2179, 16
        %s2181 = scalar_lea.vmem [#allocation3], %s2180
        // Predicated region
        $region87: #{tpu_custom_call.1} parent=81 // pred_check
          %p2182 = pneg %p191
        $region88: #{tpu_custom_call.1} parent=81 // pred_check_branch
          %2184 = sbr.rel (%p2182) target = $region90
        $region89: #{tpu_custom_call.1} parent=81 // pred_region
          %s2186 = ssub.s32 256, 256
          %2187 = vsyncadd %s2178, %s2186
          %s2188 = smul.addr %s21, 128
          %s2189 = scalar_lea.hbm %s7, %s2188
          %s2190 = sshll.u32 %s2181, 4
          %s2191 = int_to_ptr.vmem [resolvable:$true] %s2190
          %2196 = dma.vmem_to_hbm [thread:$0]  %s2191, 256, %s2189, %s2178, 128, 384, 8
        $region90: #{tpu_custom_call.1} parent=81 // pred_fallthru
          _
      $region82: #{tpu_custom_call.1} parent=5 // pred_fallthru
        _
      %p2197 = scmp.le.s32.totalorder 2, %s16
      // Predicated region
      $region91: #{tpu_custom_call.1} parent=5 // pred_check
        %p2198 = pneg %p2197
      $region92: #{tpu_custom_call.1} parent=5 // pred_check_branch
        %2200 = sbr.rel (%p2198) target = $region94
      $region93: #{tpu_custom_call.1} parent=5 // pred_region
        %s2201 = ssub.s32 %s16, 2
        // Predicated region
        $region95: #{tpu_custom_call.1} parent=93 // pred_check
          %p2202 = pneg %p197
        $region96: #{tpu_custom_call.1} parent=93 // pred_check_branch
          %2204 = sbr.rel (%p2202) target = $region98
        $region97: #{tpu_custom_call.1} parent=93 // pred_region
          %s2205 = sand.u32 %s182, 1
          %s2206 = scalar_lea.sflag [#allocation4], %s2205
          %s2207 = sand.u32 %s182, 1
          %s2208 = smul.addr %s2207, 16
          %s2209 = scalar_lea.vmem [#allocation3], %s2208
          %2210 = dma.done %s2206, 256
        $region98: #{tpu_custom_call.1} parent=93 // pred_fallthru
          _
      $region94: #{tpu_custom_call.1} parent=5 // pred_fallthru
        _
    $region6: #{tpu_custom_call.1} parent=1 // loop_footer
      %s20 = sadd.s32 1, %s16
    $region7: #{tpu_custom_call.1} parent=1 // loop_footer_branch
      %15 = sbr.rel target = $region3
    $region8: #{tpu_custom_call.1} parent=1 // loop_exit
      _
    %2211 = vsyncpa [#allocation4], 1
    %s2212 = scalar_lea.sflag [#allocation4], 1
    %2213 = vsyncpa %s2212, 1

</llo_original>
